<compile_context>
chip_gen: v7x
topology: tpu7x:2x2x1
jax: 0.10.0
libtpu: 0.0.40
codegen_flags: <defaults>
</compile_context>

<pallas_src>
import functools
import math

import jax
import jax.numpy as jnp
import numpy as np
from jax.experimental import pallas as pl
from jax.experimental.pallas import tpu as pltpu

_VMEM_LIMIT = 48 * 1024 * 1024  # safe on v5e/v6e (128 MiB) and v7x (64 MiB)


def _round_up(x, m):
    return ((x + m - 1) // m) * m


# --------------------------------------------------------------------------
# Conv2d (stride 1, 'same' padding, no bias) + fused LeakyReLU(0.003).
# Single matmul over the fused K*Cin contraction; grid tiles M (parallel).
# --------------------------------------------------------------------------
def _conv_kernel(w_ref, x_ref, o_ref, *, neg_slope):
    y = jnp.dot(w_ref[...], x_ref[...], preferred_element_type=jnp.float32)
    o_ref[...] = jnp.where(y >= 0, y, neg_slope * y).astype(o_ref.dtype)


def conv2d_leaky(x_cnhw, w2d, *, ksize, pad, neg_slope=0.003, tile_m=512):
    """x_cnhw: (Cin, N, H, W); w2d: (Cout, ksize*ksize*Cin) in (ky,kx,cin)
    row order.  Returns (Cout, N, H, W)."""
    c, n, h, w = x_cnhw.shape
    cout, kc = w2d.shape
    assert kc == ksize * ksize * c
    m = n * h * w

    # Single contiguous im2col operand, channels-first: (K*Cin, M).
    xp = jnp.pad(x_cnhw, ((0, 0), (0, 0), (pad, pad), (pad, pad)))
    taps = [xp[:, :, ky:ky + h, kx:kx + w]
            for ky in range(ksize) for kx in range(ksize)]
    xcol = jnp.stack(taps, axis=0).reshape(kc, m)          # rows: (ky,kx,cin)

    tm = min(tile_m, _round_up(m, 128))
    mpad = _round_up(m, tm)
    if mpad > m:
        xcol = jnp.pad(xcol, ((0, 0), (0, mpad - m)))

    out = pl.pallas_call(
        functools.partial(_conv_kernel, neg_slope=neg_slope),
        out_shape=jax.ShapeDtypeStruct((cout, mpad), jnp.float32),
        grid=(mpad // tm,),
        in_specs=[
            pl.BlockSpec((cout, kc), lambda i: (0, 0)),     # weight: resident
            pl.BlockSpec((kc, tm), lambda i: (0, i)),       # im2col M-tile
        ],
        out_specs=pl.BlockSpec((cout, tm), lambda i: (0, i)),
        compiler_params=pltpu.CompilerParams(
            dimension_semantics=("parallel",),
            vmem_limit_bytes=_VMEM_LIMIT),
    )(w2d, xcol)
    return out[:, :m].reshape(cout, n, h, w)


# --------------------------------------------------------------------------
# AvgPool2d(kernel=3, stride=3, padding=1), count_include_pad=True -> /9.
# Strided taps are gathered in glue (total ~= 1x input bytes), summed
# in-kernel over the tap axis; M tiled with a parallel grid axis.
# --------------------------------------------------------------------------
def _pool_kernel(x_ref, o_ref):
    o_ref[...] = (jnp.sum(x_ref[...], axis=0) * (1.0 / 9.0)).astype(o_ref.dtype)


def avgpool3x3_s3_p1(x_cnhw, *, tile_m=512):
    c, n, h, w = x_cnhw.shape
    ho = (h - 1) // 3 + 1
    wo = (w - 1) // 3 + 1
    mo = n * ho * wo
    xp = jnp.pad(x_cnhw, ((0, 0), (0, 0), (1, 1), (1, 1)))
    taps = [xp[:, :, dy:dy + 3 * (ho - 1) + 1:3, dx:dx + 3 * (wo - 1) + 1:3]
            for dy in range(3) for dx in range(3)]
    stack = jnp.stack(taps, axis=0).reshape(9, c, mo)       # (9, C, Mo)

    tm = min(tile_m, _round_up(mo, 128))
    mpad = _round_up(mo, tm)
    if mpad > mo:
        stack = jnp.pad(stack, ((0, 0), (0, 0), (0, mpad - mo)))

    out = pl.pallas_call(
        _pool_kernel,
        out_shape=jax.ShapeDtypeStruct((c, mpad), jnp.float32),
        grid=(mpad // tm,),
        in_specs=[pl.BlockSpec((9, c, tm), lambda i: (0, 0, i))],
        out_specs=pl.BlockSpec((c, tm), lambda i: (0, i)),
        compiler_params=pltpu.CompilerParams(
            dimension_semantics=("parallel",),
            vmem_limit_bytes=_VMEM_LIMIT),
    )(stack)
    return out[:, :mo].reshape(c, n, ho, wo)


# --------------------------------------------------------------------------
# Linear(in_features, num_classes) + LogSoftmax(dim=1), fused in one kernel.
# (Whole-array VMEM blocks: even at production size, N x 15120 f32 is small.)
# --------------------------------------------------------------------------
def _head_kernel(x_ref, w_ref, b_ref, o_ref):
    logits = jnp.dot(x_ref[...], w_ref[...],
                     preferred_element_type=jnp.float32) + b_ref[...]
    mx = jnp.max(logits, axis=-1, keepdims=True)
    z = logits - mx
    lse = jnp.log(jnp.sum(jnp.exp(z), axis=-1, keepdims=True))
    o_ref[...] = (z - lse).astype(o_ref.dtype)


def linear_logsoftmax(x, w, b):
    n, _ = x.shape
    ncls = w.shape[1]
    return pl.pallas_call(
        _head_kernel,
        out_shape=jax.ShapeDtypeStruct((n, ncls), jnp.float32),
        in_specs=[pl.BlockSpec(memory_space=pltpu.MemorySpace.VMEM)] * 3,
        out_specs=pl.BlockSpec(memory_space=pltpu.MemorySpace.VMEM),
        compiler_params=pltpu.CompilerParams(vmem_limit_bytes=_VMEM_LIMIT),
    )(x, w, b.reshape(1, ncls))


# --------------------------------------------------------------------------
# Deterministic parameter init (matches __init__ shapes & init scheme).
# Conv weights are stored as (Cout, K*Cin) with rows ordered (ky, kx, cin),
# matching the im2col row order.
# --------------------------------------------------------------------------
def init_params(key, num_channels, num_classes, in_features):
    k0, k1, k2, k3 = jax.random.split(key, 4)

    def conv_w(k, cin, cout, ks):
        std = math.sqrt(2.0 / (ks * ks * cout))       # torch init in module
        w = std * jax.random.normal(k, (cout, ks, ks, cin), jnp.float32)
        return w.reshape(cout, ks * ks * cin)

    w0 = conv_w(k0, num_channels, 24, 5)
    w1 = conv_w(k1, 24, 36, 5)
    w2 = conv_w(k2, 36, 54, 3)
    lim = 1.0 / math.sqrt(in_features)
    wl = jax.random.uniform(k3, (in_features, num_classes), jnp.float32,
                            minval=-lim, maxval=lim)
    bl = jnp.zeros((num_classes,), jnp.float32)       # bias zeroed in __init__
    return dict(w0=w0, w1=w1, w2=w2, wl=wl, bl=bl)


# --------------------------------------------------------------------------
# Forward pass (inference):  conv0->act0->drop0->pool0 -> conv1->act1->drop1
# ->pool1 -> conv2->act2 -> flatten(NCHW order) -> linear -> logsoftmax.
# --------------------------------------------------------------------------
def mjonet_forward(params, x_nchw, *, tile_m=512):
    n = x_nchw.shape[0]
    x = jnp.transpose(x_nchw, (1, 0, 2, 3))                   # NCHW -> CNHW
    x = conv2d_leaky(x, params["w0"], ksize=5, pad=2, tile_m=tile_m)
    # drop0: identity at inference
    # TODO(synk): train-mode dropout masking not implemented.
    x = avgpool3x3_s3_p1(x, tile_m=tile_m)                     # pool0
    x = conv2d_leaky(x, params["w1"], ksize=5, pad=2, tile_m=tile_m)
    # drop1: identity at inference
    x = avgpool3x3_s3_p1(x, tile_m=tile_m)                     # pool1
    x = conv2d_leaky(x, params["w2"], ksize=3, pad=1, tile_m=tile_m)
    # Flatten in PyTorch NCHW (C,H,W) order; conv2 output is already
    # channel-major so this is only a tiny batch/channel interleave fix-up.
    c2, _, h2, w2 = x.shape
    flat = jnp.transpose(x, (1, 0, 2, 3)).reshape(n, c2 * h2 * w2)
    return linear_logsoftmax(flat, params["wl"], params["bl"])


# --------------------------------------------------------------------------
# Pure-JAX reference (for correctness check only).
# --------------------------------------------------------------------------
def reference_forward(params, x_nchw):
    def conv(x, w2d, ks, pad):
        cout = w2d.shape[0]
        cin = w2d.shape[1] // (ks * ks)
        w_oihw = jnp.transpose(w2d.reshape(cout, ks, ks, cin), (0, 3, 1, 2))
        y = jax.lax.conv_general_dilated(
            x, w_oihw, window_strides=(1, 1),
            padding=[(pad, pad), (pad, pad)],
            dimension_numbers=("NCHW", "OIHW", "NCHW"),
            precision=jax.lax.Precision.HIGHEST)
        return jnp.where(y >= 0, y, 0.003 * y)

    def pool(x):
        y = jax.lax.reduce_window(x, 0.0, jax.lax.add, (1, 1, 3, 3),
                                  (1, 1, 3, 3),
                                  [(0, 0), (0, 0), (1, 1), (1, 1)])
        return y / 9.0

    x = conv(x_nchw, params["w0"], 5, 2)
    x = pool(x)
    x = conv(x, params["w1"], 5, 2)
    x = pool(x)
    x = conv(x, params["w2"], 3, 1)
    x = x.reshape(x.shape[0], -1)
    logits = jnp.dot(x, params["wl"],
                     precision=jax.lax.Precision.HIGHEST) + params["bl"]
    return jax.nn.log_softmax(logits, axis=-1)


if __name__ == "__main__":
    # Small test config (original model uses inputs whose flattened conv2
    # output is 15120; here in_features is derived from the small input).
    num_channels, num_classes = 4, 8
    N, H, W = 2, 18, 18

    key = jax.random.PRNGKey(0)
    kx, kp = jax.random.split(key)
    x = jax.random.normal(kx, (N, num_channels, H, W), jnp.float32)

    ho1, wo1 = (H - 1) // 3 + 1, (W - 1) // 3 + 1
    ho2, wo2 = (ho1 - 1) // 3 + 1, (wo1 - 1) // 3 + 1
    in_features = 54 * ho2 * wo2
    params = init_params(kp, num_channels, num_classes, in_features)

    fwd = jax.jit(mjonet_forward)
    out = jax.block_until_ready(fwd(params, x))

    ref = reference_forward(params, x)
    np.testing.assert_allclose(np.asarray(out), np.asarray(ref),
                               atol=2e-3, rtol=2e-3)
    assert out.shape == (N, num_classes)
    assert np.allclose(np.exp(np.asarray(out)).sum(axis=-1), 1.0, atol=1e-4)
    print("KERNEL_OK")
</pallas_src>

<mosaic_0001>
module attributes {stable_mosaic.version = 11 : i64} {
  func.func @_conv_kernel(%arg0: i32, %arg1: memref<24x100xf32, #tpu.memory_space<vmem>>, %arg2: memref<100x512xf32, #tpu.memory_space<vmem>>, %arg3: memref<24x512xf32, #tpu.memory_space<vmem>>) attributes {dimension_semantics = [#tpu.dimension_semantics<parallel>], iteration_bounds = array<i64: 2>, scalar_prefetch = 0 : i64, scratch_operands = 0 : i64, tpu.core_type = #tpu.core_type<tc>, window_params = [{pipeline_mode = #tpu.pipeline_mode<synchronous>, transform_indices = @transform_0, window_bounds = array<i64: 24, 100>}, {transform_indices = @transform_1, window_bounds = array<i64: 100, 512>}, {transform_indices = @transform_2, window_bounds = array<i64: 24, 512>}]} {
    %c0 = arith.constant 0 : index
    %c0_0 = arith.constant 0 : index
    %0 = vector.load %arg1[%c0, %c0_0] : memref<24x100xf32, #tpu.memory_space<vmem>>, vector<24x100xf32>
    %c0_1 = arith.constant 0 : index
    %c0_2 = arith.constant 0 : index
    %1 = vector.load %arg2[%c0_1, %c0_2] : memref<100x512xf32, #tpu.memory_space<vmem>>, vector<100x512xf32>
    %cst = arith.constant dense<0.000000e+00> : vector<24x512xf32>
    %2 = tpu.matmul %0, %1, %cst {dimension_numbers = #tpu.dot_dimension_numbers<[1], [0], [0], [1], [0, 0, 1, 1], [], []>} : vector<24x100xf32>, vector<100x512xf32>, vector<24x512xf32> -> vector<24x512xf32>
    %cst_3 = arith.constant 0.000000e+00 : f32
    %3 = vector.broadcast %cst_3 : f32 to vector<24x512xf32>
    %4 = arith.cmpf oge, %2, %3 : vector<24x512xf32>
    %cst_4 = arith.constant 3.000000e-03 : f32
    %5 = vector.broadcast %cst_4 : f32 to vector<24x512xf32>
    %6 = arith.mulf %5, %2 : vector<24x512xf32>
    %7 = arith.select %4, %2, %6 : vector<24x512xi1>, vector<24x512xf32>
    %c0_5 = arith.constant 0 : index
    %c0_6 = arith.constant 0 : index
    %8 = vector.load %arg3[%c0_5, %c0_6] : memref<24x512xf32, #tpu.memory_space<vmem>>, vector<24x512xf32>
    tpu.vector_store %arg3[%c0_5, %c0_6], %7 {strides = array<i32>} : memref<24x512xf32, #tpu.memory_space<vmem>>, vector<24x512xf32>,
    return
  }
  func.func @transform_0(%arg0: i32) -> (i32, i32) {
    %c0_i32 = arith.constant 0 : i32
    %c0_i32_0 = arith.constant 0 : i32
    %c0_i32_1 = arith.constant 0 : i32
    return %c0_i32, %c0_i32_0 : i32, i32
  }
  func.func @transform_1(%arg0: i32) -> (i32, i32) {
    %c0_i32 = arith.constant 0 : i32
    %c0_i32_0 = arith.constant 0 : i32
    return %c0_i32, %arg0 : i32, i32
  }
  func.func @transform_2(%arg0: i32) -> (i32, i32) {
    %c0_i32 = arith.constant 0 : i32
    %c0_i32_0 = arith.constant 0 : i32
    return %c0_i32, %arg0 : i32, i32
  }
}

module attributes {stable_mosaic.version = 11 : i64} {
  func.func @_pool_kernel(%arg0: i32, %arg1: memref<9x24x128xf32, #tpu.memory_space<vmem>>, %arg2: memref<24x128xf32, #tpu.memory_space<vmem>>) attributes {dimension_semantics = [#tpu.dimension_semantics<parallel>], iteration_bounds = array<i64: 1>, scalar_prefetch = 0 : i64, scratch_operands = 0 : i64, tpu.core_type = #tpu.core_type<tc>, window_params = [{transform_indices = @transform_0, window_bounds = array<i64: 9, 24, 128>}, {transform_indices = @transform_1, window_bounds = array<i64: 24, 128>}]} {
    %c0 = arith.constant 0 : index
    %c0_0 = arith.constant 0 : index
    %c0_1 = arith.constant 0 : index
    %0 = vector.load %arg1[%c0, %c0_0, %c0_1] : memref<9x24x128xf32, #tpu.memory_space<vmem>>, vector<9x24x128xf32>
    %cst = arith.constant dense<0.000000e+00> : vector<24x128xf32>
    %1 = vector.multi_reduction <add>, %0, %cst [0] : vector<9x24x128xf32> to vector<24x128xf32>
    %cst_2 = arith.constant 0.111111112 : f32
    %2 = vector.broadcast %cst_2 : f32 to vector<24x128xf32>
    %3 = arith.mulf %1, %2 : vector<24x128xf32>
    %c0_3 = arith.constant 0 : index
    %c0_4 = arith.constant 0 : index
    %4 = vector.load %arg2[%c0_3, %c0_4] : memref<24x128xf32, #tpu.memory_space<vmem>>, vector<24x128xf32>
    tpu.vector_store %arg2[%c0_3, %c0_4], %3 {strides = array<i32>} : memref<24x128xf32, #tpu.memory_space<vmem>>, vector<24x128xf32>,
    return
  }
  func.func @transform_0(%arg0: i32) -> (i32, i32, i32) {
    %c0_i32 = arith.constant 0 : i32
    %c0_i32_0 = arith.constant 0 : i32
    %c0_i32_1 = arith.constant 0 : i32
    return %c0_i32, %c0_i32_0, %arg0 : i32, i32, i32
  }
  func.func @transform_1(%arg0: i32) -> (i32, i32) {
    %c0_i32 = arith.constant 0 : i32
    %c0_i32_0 = arith.constant 0 : i32
    return %c0_i32, %arg0 : i32, i32
  }
}

module attributes {stable_mosaic.version = 11 : i64} {
  func.func @_conv_kernel(%arg0: i32, %arg1: memref<36x600xf32, #tpu.memory_space<vmem>>, %arg2: memref<600x128xf32, #tpu.memory_space<vmem>>, %arg3: memref<36x128xf32, #tpu.memory_space<vmem>>) attributes {dimension_semantics = [#tpu.dimension_semantics<parallel>], iteration_bounds = array<i64: 1>, scalar_prefetch = 0 : i64, scratch_operands = 0 : i64, tpu.core_type = #tpu.core_type<tc>, window_params = [{pipeline_mode = #tpu.pipeline_mode<synchronous>, transform_indices = @transform_0, window_bounds = array<i64: 36, 600>}, {transform_indices = @transform_1, window_bounds = array<i64: 600, 128>}, {transform_indices = @transform_2, window_bounds = array<i64: 36, 128>}]} {
    %c0 = arith.constant 0 : index
    %c0_0 = arith.constant 0 : index
    %0 = vector.load %arg1[%c0, %c0_0] : memref<36x600xf32, #tpu.memory_space<vmem>>, vector<36x600xf32>
    %c0_1 = arith.constant 0 : index
    %c0_2 = arith.constant 0 : index
    %1 = vector.load %arg2[%c0_1, %c0_2] : memref<600x128xf32, #tpu.memory_space<vmem>>, vector<600x128xf32>
    %cst = arith.constant dense<0.000000e+00> : vector<36x128xf32>
    %2 = tpu.matmul %0, %1, %cst {dimension_numbers = #tpu.dot_dimension_numbers<[1], [0], [0], [1], [0, 0, 1, 1], [], []>} : vector<36x600xf32>, vector<600x128xf32>, vector<36x128xf32> -> vector<36x128xf32>
    %cst_3 = arith.constant 0.000000e+00 : f32
    %3 = vector.broadcast %cst_3 : f32 to vector<36x128xf32>
    %4 = arith.cmpf oge, %2, %3 : vector<36x128xf32>
    %cst_4 = arith.constant 3.000000e-03 : f32
    %5 = vector.broadcast %cst_4 : f32 to vector<36x128xf32>
    %6 = arith.mulf %5, %2 : vector<36x128xf32>
    %7 = arith.select %4, %2, %6 : vector<36x128xi1>, vector<36x128xf32>
    %c0_5 = arith.constant 0 : index
    %c0_6 = arith.constant 0 : index
    %8 = vector.load %arg3[%c0_5, %c0_6] : memref<36x128xf32, #tpu.memory_space<vmem>>, vector<36x128xf32>
    tpu.vector_store %arg3[%c0_5, %c0_6], %7 {strides = array<i32>} : memref<36x128xf32, #tpu.memory_space<vmem>>, vector<36x128xf32>,
    return
  }
  func.func @transform_0(%arg0: i32) -> (i32, i32) {
    %c0_i32 = arith.constant 0 : i32
    %c0_i32_0 = arith.constant 0 : i32
    %c0_i32_1 = arith.constant 0 : i32
    return %c0_i32, %c0_i32_0 : i32, i32
  }
  func.func @transform_1(%arg0: i32) -> (i32, i32) {
    %c0_i32 = arith.constant 0 : i32
    %c0_i32_0 = arith.constant 0 : i32
    return %c0_i32, %arg0 : i32, i32
  }
  func.func @transform_2(%arg0: i32) -> (i32, i32) {
    %c0_i32 = arith.constant 0 : i32
    %c0_i32_0 = arith.constant 0 : i32
    return %c0_i32, %arg0 : i32, i32
  }
}

module attributes {stable_mosaic.version = 11 : i64} {
  func.func @_pool_kernel(%arg0: i32, %arg1: memref<9x36x128xf32, #tpu.memory_space<vmem>>, %arg2: memref<36x128xf32, #tpu.memory_space<vmem>>) attributes {dimension_semantics = [#tpu.dimension_semantics<parallel>], iteration_bounds = array<i64: 1>, scalar_prefetch = 0 : i64, scratch_operands = 0 : i64, tpu.core_type = #tpu.core_type<tc>, window_params = [{transform_indices = @transform_0, window_bounds = array<i64: 9, 36, 128>}, {transform_indices = @transform_1, window_bounds = array<i64: 36, 128>}]} {
    %c0 = arith.constant 0 : index
    %c0_0 = arith.constant 0 : index
    %c0_1 = arith.constant 0 : index
    %0 = vector.load %arg1[%c0, %c0_0, %c0_1] : memref<9x36x128xf32, #tpu.memory_space<vmem>>, vector<9x36x128xf32>
    %cst = arith.constant dense<0.000000e+00> : vector<36x128xf32>
    %1 = vector.multi_reduction <add>, %0, %cst [0] : vector<9x36x128xf32> to vector<36x128xf32>
    %cst_2 = arith.constant 0.111111112 : f32
    %2 = vector.broadcast %cst_2 : f32 to vector<36x128xf32>
    %3 = arith.mulf %1, %2 : vector<36x128xf32>
    %c0_3 = arith.constant 0 : index
    %c0_4 = arith.constant 0 : index
    %4 = vector.load %arg2[%c0_3, %c0_4] : memref<36x128xf32, #tpu.memory_space<vmem>>, vector<36x128xf32>
    tpu.vector_store %arg2[%c0_3, %c0_4], %3 {strides = array<i32>} : memref<36x128xf32, #tpu.memory_space<vmem>>, vector<36x128xf32>,
    return
  }
  func.func @transform_0(%arg0: i32) -> (i32, i32, i32) {
    %c0_i32 = arith.constant 0 : i32
    %c0_i32_0 = arith.constant 0 : i32
    %c0_i32_1 = arith.constant 0 : i32
    return %c0_i32, %c0_i32_0, %arg0 : i32, i32, i32
  }
  func.func @transform_1(%arg0: i32) -> (i32, i32) {
    %c0_i32 = arith.constant 0 : i32
    %c0_i32_0 = arith.constant 0 : i32
    return %c0_i32, %arg0 : i32, i32
  }
}

module attributes {stable_mosaic.version = 11 : i64} {
  func.func @_conv_kernel(%arg0: i32, %arg1: memref<54x324xf32, #tpu.memory_space<vmem>>, %arg2: memref<324x128xf32, #tpu.memory_space<vmem>>, %arg3: memref<54x128xf32, #tpu.memory_space<vmem>>) attributes {dimension_semantics = [#tpu.dimension_semantics<parallel>], iteration_bounds = array<i64: 1>, scalar_prefetch = 0 : i64, scratch_operands = 0 : i64, tpu.core_type = #tpu.core_type<tc>, window_params = [{pipeline_mode = #tpu.pipeline_mode<synchronous>, transform_indices = @transform_0, window_bounds = array<i64: 54, 324>}, {transform_indices = @transform_1, window_bounds = array<i64: 324, 128>}, {transform_indices = @transform_2, window_bounds = array<i64: 54, 128>}]} {
    %c0 = arith.constant 0 : index
    %c0_0 = arith.constant 0 : index
    %0 = vector.load %arg1[%c0, %c0_0] : memref<54x324xf32, #tpu.memory_space<vmem>>, vector<54x324xf32>
    %c0_1 = arith.constant 0 : index
    %c0_2 = arith.constant 0 : index
    %1 = vector.load %arg2[%c0_1, %c0_2] : memref<324x128xf32, #tpu.memory_space<vmem>>, vector<324x128xf32>
    %cst = arith.constant dense<0.000000e+00> : vector<54x128xf32>
    %2 = tpu.matmul %0, %1, %cst {dimension_numbers = #tpu.dot_dimension_numbers<[1], [0], [0], [1], [0, 0, 1, 1], [], []>} : vector<54x324xf32>, vector<324x128xf32>, vector<54x128xf32> -> vector<54x128xf32>
    %cst_3 = arith.constant 0.000000e+00 : f32
    %3 = vector.broadcast %cst_3 : f32 to vector<54x128xf32>
    %4 = arith.cmpf oge, %2, %3 : vector<54x128xf32>
    %cst_4 = arith.constant 3.000000e-03 : f32
    %5 = vector.broadcast %cst_4 : f32 to vector<54x128xf32>
    %6 = arith.mulf %5, %2 : vector<54x128xf32>
    %7 = arith.select %4, %2, %6 : vector<54x128xi1>, vector<54x128xf32>
    %c0_5 = arith.constant 0 : index
    %c0_6 = arith.constant 0 : index
    %8 = vector.load %arg3[%c0_5, %c0_6] : memref<54x128xf32, #tpu.memory_space<vmem>>, vector<54x128xf32>
    tpu.vector_store %arg3[%c0_5, %c0_6], %7 {strides = array<i32>} : memref<54x128xf32, #tpu.memory_space<vmem>>, vector<54x128xf32>,
    return
  }
  func.func @transform_0(%arg0: i32) -> (i32, i32) {
    %c0_i32 = arith.constant 0 : i32
    %c0_i32_0 = arith.constant 0 : i32
    %c0_i32_1 = arith.constant 0 : i32
    return %c0_i32, %c0_i32_0 : i32, i32
  }
  func.func @transform_1(%arg0: i32) -> (i32, i32) {
    %c0_i32 = arith.constant 0 : i32
    %c0_i32_0 = arith.constant 0 : i32
    return %c0_i32, %arg0 : i32, i32
  }
  func.func @transform_2(%arg0: i32) -> (i32, i32) {
    %c0_i32 = arith.constant 0 : i32
    %c0_i32_0 = arith.constant 0 : i32
    return %c0_i32, %arg0 : i32, i32
  }
}

module attributes {stable_mosaic.version = 11 : i64} {
  func.func @_head_kernel(%arg0: memref<2x216xf32, #tpu.memory_space<vmem>>, %arg1: memref<216x8xf32, #tpu.memory_space<vmem>>, %arg2: memref<1x8xf32, #tpu.memory_space<vmem>>, %arg3: memref<2x8xf32, #tpu.memory_space<vmem>>) attributes {dimension_semantics = [], scalar_prefetch = 0 : i64, scratch_operands = 0 : i64, tpu.core_type = #tpu.core_type<tc>} {
    %c0 = arith.constant 0 : index
    %c0_0 = arith.constant 0 : index
    %0 = vector.load %arg0[%c0, %c0_0] : memref<2x216xf32, #tpu.memory_space<vmem>>, vector<2x216xf32>
    %c0_1 = arith.constant 0 : index
    %c0_2 = arith.constant 0 : index
    %1 = vector.load %arg1[%c0_1, %c0_2] : memref<216x8xf32, #tpu.memory_space<vmem>>, vector<216x8xf32>
    %cst = arith.constant dense<0.000000e+00> : vector<2x8xf32>
    %2 = tpu.matmul %0, %1, %cst {dimension_numbers = #tpu.dot_dimension_numbers<[1], [0], [0], [1], [0, 0, 1, 1], [], []>} : vector<2x216xf32>, vector<216x8xf32>, vector<2x8xf32> -> vector<2x8xf32>
    %c0_3 = arith.constant 0 : index
    %c0_4 = arith.constant 0 : index
    %3 = vector.load %arg2[%c0_3, %c0_4] : memref<1x8xf32, #tpu.memory_space<vmem>>, vector<1x8xf32>
    %4 = vector.broadcast %3 : vector<1x8xf32> to vector<2x8xf32>
    %5 = arith.addf %2, %4 : vector<2x8xf32>
    %cst_5 = arith.constant dense<0xFF800000> : vector<2xf32>
    %6 = vector.multi_reduction <maximumf>, %5, %cst_5 [1] : vector<2x8xf32> to vector<2xf32>
    %7 = vector.shape_cast %6 : vector<2xf32> to vector<2x1xf32>
    %8 = vector.broadcast %7 : vector<2x1xf32> to vector<2x8xf32>
    %9 = arith.subf %5, %8 : vector<2x8xf32>
    %10 = math.exp %9 : vector<2x8xf32>
    %cst_6 = arith.constant dense<0.000000e+00> : vector<2xf32>
    %11 = vector.multi_reduction <add>, %10, %cst_6 [1] : vector<2x8xf32> to vector<2xf32>
    %12 = vector.shape_cast %11 : vector<2xf32> to vector<2x1xf32>
    %13 = math.log %12 : vector<2x1xf32>
    %14 = vector.broadcast %13 : vector<2x1xf32> to vector<2x8xf32>
    %15 = arith.subf %9, %14 : vector<2x8xf32>
    %c0_7 = arith.constant 0 : index
    %c0_8 = arith.constant 0 : index
    %16 = vector.load %arg3[%c0_7, %c0_8] : memref<2x8xf32, #tpu.memory_space<vmem>>, vector<2x8xf32>
    tpu.vector_store %arg3[%c0_7, %c0_8], %15 {strides = array<i32>} : memref<2x8xf32, #tpu.memory_space<vmem>>, vector<2x8xf32>,
    return
  }
}

</mosaic_0001>

<llo_original>
// kernel: mjonet_forward.6
$region0: #{mjonet_forward.6}
  #allocation0 [shape = 'u32[]', space=smem, size = 0x4, offset = 0x4, fixed_abs, tag = 'smem constant byte address 0x4 - core index']
  #allocation1 [shape = 'u32[144,128]{1,0:T(1,128)}', space=vmem, size = 0x12000, scoped, tag = 'internal scratch']
  %s0 = inlined_call_operand.vmem [shape: f32[24,100], index: 0, kind: input, shape index: {}]
  %s1 = inlined_call_operand.vmem [shape: f32[100,1024], index: 1, kind: input, shape index: {}]
  %s2 = inlined_call_operand.vmem [shape: f32[24,1024], index: 2, kind: output, shape index: {}]
  %s3 = sld [smem:[#allocation0]]
  $region83: #{mjonet_forward.6} parent=0
    _
  %s5 = ssub.s32 1, %s3
  %s6 = scalar_select 0, %s5, %s3
  $region1: #{mjonet_forward.6} parent=0
    #allocation2 [shape = 'u8[425984]{0}', space=vmem, size = 0x68000, scoped, tag = 'input window, operand 1']
    #allocation3 [shape = 'u8[98304]{0}', space=vmem, size = 0x18000, scoped, tag = 'output window, operand 0']
    loop: start=0, step=1, limit=4
    $region2: #{mjonet_forward.6} parent=1 // loop_pre_header
      _
    $region3: #{mjonet_forward.6} parent=1 // loop_header
      %s8 = sphi 0, %s12
      %p9 = scmp.ge.s32.totalorder %s8, 4
      %s16 = sphi 0, %s16
      %s18 = sphi 0, %s16
      %s19 = sphi 0, %s18
      %s33 = sphi 0, %s19
      %s39 = sphi 0, %s41
      %s42 = sphi 0, %s39
      %s43 = sphi 0, %s42
      %s59 = sphi 0, %s43
      %s65 = sphi 0, %s67
      %s68 = sphi 0, %s65
      %s69 = sphi 0, %s68
      %s85 = sphi 0, %s69
    $region4: #{mjonet_forward.6} parent=1 // loop_header_branch
      %11 = sbr.rel (%p9) target = $region8
    $region5: #{mjonet_forward.6} parent=1 // loop_body
      %s13 = ssub.s32 %s8, 1
      %s14 = ssub.s32 %s8, 2
      %s15 = sadd.s32 %s8, 1
      %s17 = sadd.s32 %s16, 1
      %p20 = scmp.eq.s32.totalorder %s8, 1
      %p21 = scmp.ne.s32.totalorder %s16, %s18
      %p22 = scmp.eq.s32.totalorder %s8, 0
      %p23 = por %p21, %p22
      %p24 = scmp.ne.s32.totalorder %s16, %s18
      %p25 = scmp.eq.s32.totalorder %s13, 1
      %p26 = por %p24, %p25
      %p27 = scmp.ne.s32.totalorder %s18, %s19
      %p28 = scmp.eq.s32.totalorder %s13, 0
      %p29 = por %p27, %p28
      %p30 = scmp.ne.s32.totalorder %s18, %s19
      %p31 = scmp.eq.s32.totalorder %s14, 1
      %p32 = por %p30, %p31
      %p34 = scmp.ne.s32.totalorder %s19, %s33
      %p35 = scmp.eq.s32.totalorder %s14, 0
      %p36 = por %p34, %p35
      %s37 = ssub.s32 %s8, %s15
      %p38 = scmp.eq.s32.totalorder %s37, 0
      %s40 = sadd.s32 %s39, 1
      %s41 = scalar_select %p38, %s39, %s40
      %p44 = pneg %p38
      %p45 = scmp.eq.s32.totalorder %s8, 1
      %p46 = por %p44, %p45
      %p47 = scmp.ne.s32.totalorder %s39, %s42
      %p48 = scmp.eq.s32.totalorder %s8, 0
      %p49 = por %p47, %p48
      %p50 = scmp.ne.s32.totalorder %s39, %s42
      %p51 = scmp.eq.s32.totalorder %s13, 1
      %p52 = por %p50, %p51
      %p53 = scmp.ne.s32.totalorder %s42, %s43
      %p54 = scmp.eq.s32.totalorder %s13, 0
      %p55 = por %p53, %p54
      %p56 = scmp.ne.s32.totalorder %s42, %s43
      %p57 = scmp.eq.s32.totalorder %s14, 1
      %p58 = por %p56, %p57
      %p60 = scmp.ne.s32.totalorder %s43, %s59
      %p61 = scmp.eq.s32.totalorder %s14, 0
      %p62 = por %p60, %p61
      %s63 = ssub.s32 %s8, %s15
      %p64 = scmp.eq.s32.totalorder %s63, 0
      %s66 = sadd.s32 %s65, 1
      %s67 = scalar_select %p64, %s65, %s66
      %p70 = pneg %p64
      %p71 = scmp.eq.s32.totalorder %s8, 1
      %p72 = por %p70, %p71
      %p73 = scmp.ne.s32.totalorder %s65, %s68
      %p74 = scmp.eq.s32.totalorder %s8, 0
      %p75 = por %p73, %p74
      %p76 = scmp.ne.s32.totalorder %s65, %s68
      %p77 = scmp.eq.s32.totalorder %s13, 1
      %p78 = por %p76, %p77
      %p79 = scmp.ne.s32.totalorder %s68, %s69
      %p80 = scmp.eq.s32.totalorder %s13, 0
      %p81 = por %p79, %p80
      %p82 = scmp.ne.s32.totalorder %s68, %s69
      %p83 = scmp.eq.s32.totalorder %s14, 1
      %p84 = por %p82, %p83
      %p86 = scmp.ne.s32.totalorder %s69, %s85
      %p87 = scmp.eq.s32.totalorder %s14, 0
      %p88 = por %p86, %p87
      %p89 = scmp.le.s32.totalorder 1, %s8
      %p90 = scmp.lt.s32.totalorder %s8, 3
      %p91 = pnand %p89, %p90
      %p92 = pneg %p91
      // Predicated region
      $region9: #{mjonet_forward.6} parent=5 // pred_check
        _
      $region10: #{mjonet_forward.6} parent=5 // pred_check_branch
        %94 = sbr.rel (%p91) target = $region12
      $region11: #{mjonet_forward.6} parent=5 // pred_region
        %s95 = ssub.s32 %s8, 1
        // Predicated region
        $region13: #{mjonet_forward.6} parent=11 // pred_check
          %p96 = pneg %p29
        $region14: #{mjonet_forward.6} parent=11 // pred_check_branch
          %98 = sbr.rel (%p96) target = $region16
        $region15: #{mjonet_forward.6} parent=11 // pred_region
          _
        $region16: #{mjonet_forward.6} parent=11 // pred_fallthru
          _
      $region12: #{mjonet_forward.6} parent=5 // pred_fallthru
        _
      %p99 = scmp.lt.s32.totalorder %s8, 2
      // Predicated region
      $region17: #{mjonet_forward.6} parent=5 // pred_check
        %p100 = pneg %p99
      $region18: #{mjonet_forward.6} parent=5 // pred_check_branch
        %102 = sbr.rel (%p100) target = $region20
      $region19: #{mjonet_forward.6} parent=5 // pred_region
        // Predicated region
        $region21: #{mjonet_forward.6} parent=19 // pred_check
          %p103 = pneg %p49
        $region22: #{mjonet_forward.6} parent=19 // pred_check_branch
          %105 = sbr.rel (%p103) target = $region24
        $region23: #{mjonet_forward.6} parent=19 // pred_region
          %s106 = sand.u32 %s39, 1
          %s107 = sand.u32 %s39, 1
          %s108 = smul.addr %s107, 416
          %s109 = scalar_lea.vmem [#allocation2], %s108
          %s110 = smul.u32 4, %s8
          %s111 = smul.addr %s110, 8
          %s112 = scalar_lea.vmem %s1, %s111
          // Predicated region
          $region25: #{mjonet_forward.6} parent=23 // pred_check
            _
          $region26: #{mjonet_forward.6} parent=23 // pred_check_branch
            %114 = sbr.rel (0) target = $region28
          $region27: #{mjonet_forward.6} parent=23 // pred_region
            // Predicated region
            $region29: #{mjonet_forward.6} parent=27 // pred_check
              _
            $region30: #{mjonet_forward.6} parent=27 // pred_check_branch
              %116 = sbr.rel (0) target = $region32
            $region31: #{mjonet_forward.6} parent=27 // pred_region
              loop: start=0, step=1, limit=1
              $region33: #{mjonet_forward.6} parent=31 // loop_pre_header
                _
              $region34: #{mjonet_forward.6} parent=31 // loop_header
                %s118 = sphi 0, %s122
                %p119 = scmp.ge.s32.totalorder %s118, 1
                %s123 = sphi %s112, %s112
                %s124 = sphi %s109, %s109
              $region35: #{mjonet_forward.6} parent=31 // loop_header_branch
                %121 = sbr.rel (%p119) target = $region39
              $region36: #{mjonet_forward.6} parent=31 // loop_body
                %v125 = vld [vmem:[%s123] sm:$0xff]
                %126 = vst [vmem:[%s124] sm:$0xff] %v125
                %v127 = vld [vmem:[%s123 + $0x8] sm:$0xff]
                %128 = vst [vmem:[%s124 + $0x8] sm:$0xff] %v127
                %v129 = vld [vmem:[%s123 + $0x10] sm:$0xff]
                %130 = vst [vmem:[%s124 + $0x10] sm:$0xff] %v129
                %v131 = vld [vmem:[%s123 + $0x18] sm:$0xff]
                %132 = vst [vmem:[%s124 + $0x18] sm:$0xff] %v131
                %v133 = vld [vmem:[%s123 + $0x40] sm:$0xff]
                %134 = vst [vmem:[%s124 + $0x20] sm:$0xff] %v133
                %v135 = vld [vmem:[%s123 + $0x48] sm:$0xff]
                %136 = vst [vmem:[%s124 + $0x28] sm:$0xff] %v135
                %v137 = vld [vmem:[%s123 + $0x50] sm:$0xff]
                %138 = vst [vmem:[%s124 + $0x30] sm:$0xff] %v137
                %v139 = vld [vmem:[%s123 + $0x58] sm:$0xff]
                %140 = vst [vmem:[%s124 + $0x38] sm:$0xff] %v139
                %v141 = vld [vmem:[%s123 + $0x80] sm:$0xff]
                %142 = vst [vmem:[%s124 + $0x40] sm:$0xff] %v141
                %v143 = vld [vmem:[%s123 + $0x88] sm:$0xff]
                %144 = vst [vmem:[%s124 + $0x48] sm:$0xff] %v143
                %v145 = vld [vmem:[%s123 + $0x90] sm:$0xff]
                %146 = vst [vmem:[%s124 + $0x50] sm:$0xff] %v145
                %v147 = vld [vmem:[%s123 + $0x98] sm:$0xff]
                %148 = vst [vmem:[%s124 + $0x58] sm:$0xff] %v147
                %v149 = vld [vmem:[%s123 + $0xc0] sm:$0xff]
                %150 = vst [vmem:[%s124 + $0x60] sm:$0xff] %v149
                %v151 = vld [vmem:[%s123 + $0xc8] sm:$0xff]
                %152 = vst [vmem:[%s124 + $0x68] sm:$0xff] %v151
                %v153 = vld [vmem:[%s123 + $0xd0] sm:$0xff]
                %154 = vst [vmem:[%s124 + $0x70] sm:$0xff] %v153
                %v155 = vld [vmem:[%s123 + $0xd8] sm:$0xff]
                %156 = vst [vmem:[%s124 + $0x78] sm:$0xff] %v155
                %v157 = vld [vmem:[%s123 + $0x100] sm:$0xff]
                %158 = vst [vmem:[%s124 + $0x80] sm:$0xff] %v157
                %v159 = vld [vmem:[%s123 + $0x108] sm:$0xff]
                %160 = vst [vmem:[%s124 + $0x88] sm:$0xff] %v159
                %v161 = vld [vmem:[%s123 + $0x110] sm:$0xff]
                %162 = vst [vmem:[%s124 + $0x90] sm:$0xff] %v161
                %v163 = vld [vmem:[%s123 + $0x118] sm:$0xff]
                %164 = vst [vmem:[%s124 + $0x98] sm:$0xff] %v163
                %v165 = vld [vmem:[%s123 + $0x140] sm:$0xff]
                %166 = vst [vmem:[%s124 + $0xa0] sm:$0xff] %v165
                %v167 = vld [vmem:[%s123 + $0x148] sm:$0xff]
                %168 = vst [vmem:[%s124 + $0xa8] sm:$0xff] %v167
                %v169 = vld [vmem:[%s123 + $0x150] sm:$0xff]
                %170 = vst [vmem:[%s124 + $0xb0] sm:$0xff] %v169
                %v171 = vld [vmem:[%s123 + $0x158] sm:$0xff]
                %172 = vst [vmem:[%s124 + $0xb8] sm:$0xff] %v171
                %v173 = vld [vmem:[%s123 + $0x180] sm:$0xff]
                %174 = vst [vmem:[%s124 + $0xc0] sm:$0xff] %v173
                %v175 = vld [vmem:[%s123 + $0x188] sm:$0xff]
                %176 = vst [vmem:[%s124 + $0xc8] sm:$0xff] %v175
                %v177 = vld [vmem:[%s123 + $0x190] sm:$0xff]
                %178 = vst [vmem:[%s124 + $0xd0] sm:$0xff] %v177
                %v179 = vld [vmem:[%s123 + $0x198] sm:$0xff]
                %180 = vst [vmem:[%s124 + $0xd8] sm:$0xff] %v179
                %v181 = vld [vmem:[%s123 + $0x1c0] sm:$0xff]
                %182 = vst [vmem:[%s124 + $0xe0] sm:$0xff] %v181
                %v183 = vld [vmem:[%s123 + $0x1c8] sm:$0xff]
                %184 = vst [vmem:[%s124 + $0xe8] sm:$0xff] %v183
                %v185 = vld [vmem:[%s123 + $0x1d0] sm:$0xff]
                %186 = vst [vmem:[%s124 + $0xf0] sm:$0xff] %v185
                %v187 = vld [vmem:[%s123 + $0x1d8] sm:$0xff]
                %188 = vst [vmem:[%s124 + $0xf8] sm:$0xff] %v187
                %v189 = vld [vmem:[%s123 + $0x200] sm:$0xff]
                %190 = vst [vmem:[%s124 + $0x100] sm:$0xff] %v189
                %v191 = vld [vmem:[%s123 + $0x208] sm:$0xff]
                %192 = vst [vmem:[%s124 + $0x108] sm:$0xff] %v191
                %v193 = vld [vmem:[%s123 + $0x210] sm:$0xff]
                %194 = vst [vmem:[%s124 + $0x110] sm:$0xff] %v193
                %v195 = vld [vmem:[%s123 + $0x218] sm:$0xff]
                %196 = vst [vmem:[%s124 + $0x118] sm:$0xff] %v195
                %v197 = vld [vmem:[%s123 + $0x240] sm:$0xff]
                %198 = vst [vmem:[%s124 + $0x120] sm:$0xff] %v197
                %v199 = vld [vmem:[%s123 + $0x248] sm:$0xff]
                %200 = vst [vmem:[%s124 + $0x128] sm:$0xff] %v199
                %v201 = vld [vmem:[%s123 + $0x250] sm:$0xff]
                %202 = vst [vmem:[%s124 + $0x130] sm:$0xff] %v201
                %v203 = vld [vmem:[%s123 + $0x258] sm:$0xff]
                %204 = vst [vmem:[%s124 + $0x138] sm:$0xff] %v203
                %v205 = vld [vmem:[%s123 + $0x280] sm:$0xff]
                %206 = vst [vmem:[%s124 + $0x140] sm:$0xff] %v205
                %v207 = vld [vmem:[%s123 + $0x288] sm:$0xff]
                %208 = vst [vmem:[%s124 + $0x148] sm:$0xff] %v207
                %v209 = vld [vmem:[%s123 + $0x290] sm:$0xff]
                %210 = vst [vmem:[%s124 + $0x150] sm:$0xff] %v209
                %v211 = vld [vmem:[%s123 + $0x298] sm:$0xff]
                %212 = vst [vmem:[%s124 + $0x158] sm:$0xff] %v211
                %v213 = vld [vmem:[%s123 + $0x2c0] sm:$0xff]
                %214 = vst [vmem:[%s124 + $0x160] sm:$0xff] %v213
                %v215 = vld [vmem:[%s123 + $0x2c8] sm:$0xff]
                %216 = vst [vmem:[%s124 + $0x168] sm:$0xff] %v215
                %v217 = vld [vmem:[%s123 + $0x2d0] sm:$0xff]
                %218 = vst [vmem:[%s124 + $0x170] sm:$0xff] %v217
                %v219 = vld [vmem:[%s123 + $0x2d8] sm:$0xff]
                %220 = vst [vmem:[%s124 + $0x178] sm:$0xff] %v219
                %v221 = vld [vmem:[%s123 + $0x300] sm:$0xff]
                %222 = vst [vmem:[%s124 + $0x180] sm:$0xff] %v221
                %v223 = vld [vmem:[%s123 + $0x308] sm:$0xff]
                %224 = vst [vmem:[%s124 + $0x188] sm:$0xff] %v223
                %v225 = vld [vmem:[%s123 + $0x310] sm:$0xff]
                %226 = vst [vmem:[%s124 + $0x190] sm:$0xff] %v225
                %v227 = vld [vmem:[%s123 + $0x318] sm:$0xff]
                %228 = vst [vmem:[%s124 + $0x198] sm:$0xff] %v227
              $region37: #{mjonet_forward.6} parent=31 // loop_footer
                %s122 = sadd.s32 1, %s118
              $region38: #{mjonet_forward.6} parent=31 // loop_footer_branch
                %117 = sbr.rel target = $region34
              $region39: #{mjonet_forward.6} parent=31 // loop_exit
                _
            $region32: #{mjonet_forward.6} parent=27 // pred_fallthru
              _
            // Predicated region
            $region40: #{mjonet_forward.6} parent=27 // pred_check
              _
            $region41: #{mjonet_forward.6} parent=27 // pred_check_branch
              %230 = sbr.rel target = $region43
            $region42: #{mjonet_forward.6} parent=27 // pred_region
              _
            $region43: #{mjonet_forward.6} parent=27 // pred_fallthru
              _
          $region28: #{mjonet_forward.6} parent=23 // pred_fallthru
            _
          %231 = vnop
        $region24: #{mjonet_forward.6} parent=19 // pred_fallthru
          _
      $region20: #{mjonet_forward.6} parent=5 // pred_fallthru
        _
      %p232 = scmp.le.s32.totalorder 1, %s8
      %p233 = scmp.lt.s32.totalorder %s8, 3
      %p234 = pnand %p232, %p233
      %p235 = pneg %p234
      // Predicated region
      $region44: #{mjonet_forward.6} parent=5 // pred_check
        _
      $region45: #{mjonet_forward.6} parent=5 // pred_check_branch
        %237 = sbr.rel (%p234) target = $region47
      $region46: #{mjonet_forward.6} parent=5 // pred_region
        %s238 = ssub.s32 %s8, 1
        %s239 = sand.u32 %s42, 1
        %s240 = sand.u32 %s42, 1
        %s241 = smul.addr %s240, 416
        %s242 = scalar_lea.vmem [#allocation2], %s241
        // Predicated region
        $region48: #{mjonet_forward.6} parent=46 // pred_check
          %p243 = pneg %p55
        $region49: #{mjonet_forward.6} parent=46 // pred_check_branch
          %245 = sbr.rel (%p243) target = $region51
        $region50: #{mjonet_forward.6} parent=46 // pred_region
          _
        $region51: #{mjonet_forward.6} parent=46 // pred_fallthru
          _
        %p246 = pneg %p29
        %p247 = pneg %p26
        %s248 = sand.u32 %s42, 1
        %s249 = sand.u32 %s42, 1
        %s250 = smul.addr %s249, 416
        %s251 = scalar_lea.vmem [#allocation2], %s250
        %p252 = pneg %p55
        %p253 = pneg %p52
        %p254 = pneg %p81
        %p255 = pneg %p78
        %s256 = sand.u32 %s68, 1
        %s257 = sand.u32 %s68, 1
        %s258 = smul.addr %s257, 96
        %s259 = scalar_lea.vmem [#allocation3], %s258
        %s260 = smul.u32 4, %s13
        %s261 = smul.u32 4, %s13
        %v262 = vld [vmem:[%s0] sm:$0xff]
        %v263 = vld [vmem:[%s0 + $0x8] sm:$0xff]
        %v264 = vld [vmem:[%s0 + $0x10] sm:$0xff]
        %v265 = vld [vmem:[%s242] sm:$0xff]
        %v266 = vld [vmem:[%s242 + $0x8] sm:$0xff]
        %v267 = vld [vmem:[%s242 + $0x10] sm:$0xff]
        %v268 = vld [vmem:[%s242 + $0x18] sm:$0xff]
        %v269 = vld [vmem:[%s242 + $0x20] sm:$0xff]
        %v270 = vld [vmem:[%s242 + $0x28] sm:$0xff]
        %v271 = vld [vmem:[%s242 + $0x30] sm:$0xff]
        %v272 = vld [vmem:[%s242 + $0x38] sm:$0xff]
        %v273 = vld [vmem:[%s242 + $0x40] sm:$0xff]
        %v274 = vld [vmem:[%s242 + $0x48] sm:$0xff]
        %v275 = vld [vmem:[%s242 + $0x50] sm:$0xff]
        %v276 = vld [vmem:[%s242 + $0x58] sm:$0xff]
        %v277 = vld [vmem:[%s242 + $0x60] sm:$0xff]
        %v278 = vld [vmem:[%s242 + $0x68] sm:$0xff]
        %v279 = vld [vmem:[%s242 + $0x70] sm:$0xff]
        %v280 = vld [vmem:[%s242 + $0x78] sm:$0xff]
        %v281 = vld [vmem:[%s242 + $0x80] sm:$0xff]
        %v282 = vld [vmem:[%s242 + $0x88] sm:$0xff]
        %v283 = vld [vmem:[%s242 + $0x90] sm:$0xff]
        %v284 = vld [vmem:[%s242 + $0x98] sm:$0xff]
        %v285 = vld [vmem:[%s242 + $0xa0] sm:$0xff]
        %v286 = vld [vmem:[%s242 + $0xa8] sm:$0xff]
        %v287 = vld [vmem:[%s242 + $0xb0] sm:$0xff]
        %v288 = vld [vmem:[%s242 + $0xb8] sm:$0xff]
        %v289 = vld [vmem:[%s242 + $0xc0] sm:$0xff]
        %v290 = vld [vmem:[%s242 + $0xc8] sm:$0xff]
        %v291 = vld [vmem:[%s242 + $0xd0] sm:$0xff]
        %v292 = vld [vmem:[%s242 + $0xd8] sm:$0xff]
        %v293 = vld [vmem:[%s242 + $0xe0] sm:$0xff]
        %v294 = vld [vmem:[%s242 + $0xe8] sm:$0xff]
        %v295 = vld [vmem:[%s242 + $0xf0] sm:$0xff]
        %v296 = vld [vmem:[%s242 + $0xf8] sm:$0xff]
        %v297 = vld [vmem:[%s242 + $0x100] sm:$0xff]
        %v298 = vld [vmem:[%s242 + $0x108] sm:$0xff]
        %v299 = vld [vmem:[%s242 + $0x110] sm:$0xff]
        %v300 = vld [vmem:[%s242 + $0x118] sm:$0xff]
        %v301 = vld [vmem:[%s242 + $0x120] sm:$0xff]
        %v302 = vld [vmem:[%s242 + $0x128] sm:$0xff]
        %v303 = vld [vmem:[%s242 + $0x130] sm:$0xff]
        %v304 = vld [vmem:[%s242 + $0x138] sm:$0xff]
        %v305 = vld [vmem:[%s242 + $0x140] sm:$0xff]
        %v306 = vld [vmem:[%s242 + $0x148] sm:$0xff]
        %v307 = vld [vmem:[%s242 + $0x150] sm:$0xff]
        %v308 = vld [vmem:[%s242 + $0x158] sm:$0xff]
        %v309 = vld [vmem:[%s242 + $0x160] sm:$0xff]
        %v310 = vld [vmem:[%s242 + $0x168] sm:$0xff]
        %v311 = vld [vmem:[%s242 + $0x170] sm:$0xff]
        %v312 = vld [vmem:[%s242 + $0x178] sm:$0xff]
        %v313 = vld [vmem:[%s242 + $0x180] sm:$0xf]
        %v314 = vld [vmem:[%s242 + $0x188] sm:$0xf]
        %v315 = vld [vmem:[%s242 + $0x190] sm:$0xf]
        %v316 = vld [vmem:[%s242 + $0x198] sm:$0xf]
        %vm317 = vcmask 818176
        %v319 = vsel %vm317, %v262, 0
        %v322 = vsel %vm317, %v263, 0
        %v325 = vsel %vm317, %v264, 0
        %vm327 = vcmask 1043456
        %v329 = vsel %vm327, %v313, 0
        %v332 = vsel %vm327, %v314, 0
        %v335 = vsel %vm327, %v315, 0
        %v338 = vsel %vm327, %v316, 0
        %340 = vmatprep.subr.mxu0 %v266
        %341 = vmatpush1.msra.mxu0 %v265
        %342 = vmatprep.subr.mxu0 %v270
        %343 = vmatpush1.msra.mxu0 %v269
        %344 = vmatprep.subr.mxu0 %v274
        %345 = vmatpush1.msra.mxu0 %v273
        %346 = vmatprep.subr.mxu0 %v278
        %347 = vmatpush1.msra.mxu0 %v277
        %348 = vmatprep.subr.mxu0 %v282
        %349 = vmatpush1.msra.mxu0 %v281
        %350 = vmatprep.subr.mxu0 %v286
        %351 = vmatpush1.msra.mxu0 %v285
        %352 = vmatprep.subr.mxu0 %v290
        %353 = vmatpush1.msra.mxu0 %v289
        %354 = vmatprep.subr.mxu0 %v294
        %355 = vmatpush1.msra.mxu0 %v293
        %356 = vmatprep.subr.mxu0 %v298
        %357 = vmatpush1.msra.mxu0 %v297
        %358 = vmatprep.subr.mxu0 %v302
        %359 = vmatpush1.msra.mxu0 %v301
        %360 = vmatprep.subr.mxu0 %v306
        %361 = vmatpush1.msra.mxu0 %v305
        %362 = vmatprep.subr.mxu0 %v310
        %363 = vmatpush1.msra.mxu0 %v309
        %364 = vmatprep.subr.mxu0 %v332
        %365 = vmatpush1.msra.mxu0 %v329
        %366 = vmatprep.subr.mxu0 0.0
        %367 = vmatpush1.msra.mxu0 0.0
        %368 = vmatprep.subr.mxu0 0.0
        %369 = vmatpush1.msra.mxu0 0.0
        %370 = vmatprep.subr.mxu0 0.0
        %371 = vmatpush1.msra.mxu0 0.0
        %372 = vmatprep.subr.mxu0 0.0
        %373 = vmatpush1.msra.mxu0 0.0
        %374 = vmatprep.subr.mxu0 0.0
        %375 = vmatpush1.msra.mxu0 0.0
        %376 = vmatprep.subr.mxu0 0.0
        %377 = vmatpush1.msra.mxu0 0.0
        %378 = vmatprep.subr.mxu0 0.0
        %379 = vmatpush1.msra.mxu0 0.0
        %380 = vmatprep.subr.mxu0 0.0
        %381 = vmatpush1.msra.mxu0 0.0
        %382 = vmatprep.subr.mxu0 0.0
        %383 = vmatpush1.msra.mxu0 0.0
        %384 = vmatprep.subr.mxu0 0.0
        %385 = vmatpush1.msra.mxu0 0.0
        %386 = vmatprep.subr.mxu0 0.0
        %387 = vmatpush1.msra.mxu0 0.0
        %388 = vmatprep.subr.mxu0 0.0
        %389 = vmatpush1.msra.mxu0 0.0
        %390 = vmatprep.subr.mxu0 0.0
        %391 = vmatpush1.msra.mxu0 0.0
        %392 = vmatprep.subr.mxu0 0.0
        %393 = vmatpush1.msra.mxu0 0.0
        %394 = vmatprep.subr.mxu0 0.0
        %395 = vmatpush1.msra.mxu0 0.0
        %396 = vmatprep.subr.mxu0 0.0
        %397 = vmatpush1.msra.mxu0 0.0
        %398 = vmatprep.subr.mxu0 0.0
        %399 = vmatpush1.msra.mxu0 0.0
        %400 = vmatprep.subr.mxu0 0.0
        %401 = vmatpush1.msra.mxu0 0.0
        %402 = vmatprep.subr.mxu0 0.0
        %403 = vmatpush1.msra.mxu0 0.0
        %404 = vmatprep.mubr.f32.mxu0 0.0
        %405 = vmatmul.mubr.f32.gmra.mrb[0].mxu0 %v319
        %v406 = vpop.f32.mrb[0].mxu0
        %v407 = vadd.f32 0.0, %v406
        %v408 = vpop.f32.mrb[0].mxu0
        %v409 = vadd.f32 0.0, %v408
        %410 = vmatprep.mubr.f32.mxu0 0.0
        %411 = vmatmul.mubr.f32.gmra.mrb[0].mxu0 %v322
        %v412 = vpop.f32.mrb[0].mxu0
        %v413 = vadd.f32 0.0, %v412
        %v414 = vpop.f32.mrb[0].mxu0
        %v415 = vadd.f32 0.0, %v414
        %416 = vmatprep.mubr.f32.mxu0 0.0
        %417 = vmatmul.mubr.f32.gmra.mrb[0].mxu0 %v325
        %v418 = vpop.f32.mrb[0].mxu0
        %v419 = vadd.f32 0.0, %v418
        %v420 = vpop.f32.mrb[0].mxu0
        %v421 = vadd.f32 0.0, %v420
        %422 = vdwg.mxu0
        %423 = vmatprep.subr.mxu0 %v268
        %424 = vmatpush1.msra.mxu0 %v267
        %425 = vmatprep.subr.mxu0 %v272
        %426 = vmatpush1.msra.mxu0 %v271
        %427 = vmatprep.subr.mxu0 %v276
        %428 = vmatpush1.msra.mxu0 %v275
        %429 = vmatprep.subr.mxu0 %v280
        %430 = vmatpush1.msra.mxu0 %v279
        %431 = vmatprep.subr.mxu0 %v284
        %432 = vmatpush1.msra.mxu0 %v283
        %433 = vmatprep.subr.mxu0 %v288
        %434 = vmatpush1.msra.mxu0 %v287
        %435 = vmatprep.subr.mxu0 %v292
        %436 = vmatpush1.msra.mxu0 %v291
        %437 = vmatprep.subr.mxu0 %v296
        %438 = vmatpush1.msra.mxu0 %v295
        %439 = vmatprep.subr.mxu0 %v300
        %440 = vmatpush1.msra.mxu0 %v299
        %441 = vmatprep.subr.mxu0 %v304
        %442 = vmatpush1.msra.mxu0 %v303
        %443 = vmatprep.subr.mxu0 %v308
        %444 = vmatpush1.msra.mxu0 %v307
        %445 = vmatprep.subr.mxu0 %v312
        %446 = vmatpush1.msra.mxu0 %v311
        %447 = vmatprep.subr.mxu0 %v338
        %448 = vmatpush1.msra.mxu0 %v335
        %449 = vmatprep.subr.mxu0 0.0
        %450 = vmatpush1.msra.mxu0 0.0
        %451 = vmatprep.subr.mxu0 0.0
        %452 = vmatpush1.msra.mxu0 0.0
        %453 = vmatprep.subr.mxu0 0.0
        %454 = vmatpush1.msra.mxu0 0.0
        %455 = vmatprep.subr.mxu0 0.0
        %456 = vmatpush1.msra.mxu0 0.0
        %457 = vmatprep.subr.mxu0 0.0
        %458 = vmatpush1.msra.mxu0 0.0
        %459 = vmatprep.subr.mxu0 0.0
        %460 = vmatpush1.msra.mxu0 0.0
        %461 = vmatprep.subr.mxu0 0.0
        %462 = vmatpush1.msra.mxu0 0.0
        %463 = vmatprep.subr.mxu0 0.0
        %464 = vmatpush1.msra.mxu0 0.0
        %465 = vmatprep.subr.mxu0 0.0
        %466 = vmatpush1.msra.mxu0 0.0
        %467 = vmatprep.subr.mxu0 0.0
        %468 = vmatpush1.msra.mxu0 0.0
        %469 = vmatprep.subr.mxu0 0.0
        %470 = vmatpush1.msra.mxu0 0.0
        %471 = vmatprep.subr.mxu0 0.0
        %472 = vmatpush1.msra.mxu0 0.0
        %473 = vmatprep.subr.mxu0 0.0
        %474 = vmatpush1.msra.mxu0 0.0
        %475 = vmatprep.subr.mxu0 0.0
        %476 = vmatpush1.msra.mxu0 0.0
        %477 = vmatprep.subr.mxu0 0.0
        %478 = vmatpush1.msra.mxu0 0.0
        %479 = vmatprep.subr.mxu0 0.0
        %480 = vmatpush1.msra.mxu0 0.0
        %481 = vmatprep.subr.mxu0 0.0
        %482 = vmatpush1.msra.mxu0 0.0
        %483 = vmatprep.subr.mxu0 0.0
        %484 = vmatpush1.msra.mxu0 0.0
        %485 = vmatprep.subr.mxu0 0.0
        %486 = vmatpush1.msra.mxu0 0.0
        %487 = vmatprep.mubr.f32.mxu0 0.0
        %488 = vmatmul.mubr.f32.gmra.mrb[0].mxu0 %v319
        %v489 = vpop.f32.mrb[0].mxu0
        %v490 = vadd.f32 0.0, %v489
        %v491 = vpop.f32.mrb[0].mxu0
        %v492 = vadd.f32 0.0, %v491
        %493 = vmatprep.mubr.f32.mxu0 0.0
        %494 = vmatmul.mubr.f32.gmra.mrb[0].mxu0 %v322
        %v495 = vpop.f32.mrb[0].mxu0
        %v496 = vadd.f32 0.0, %v495
        %v497 = vpop.f32.mrb[0].mxu0
        %v498 = vadd.f32 0.0, %v497
        %499 = vmatprep.mubr.f32.mxu0 0.0
        %500 = vmatmul.mubr.f32.gmra.mrb[0].mxu0 %v325
        %v501 = vpop.f32.mrb[0].mxu0
        %v502 = vadd.f32 0.0, %v501
        %v503 = vpop.f32.mrb[0].mxu0
        %v504 = vadd.f32 0.0, %v503
        %505 = vdwg.mxu0
        %vm506 = vcmp.ge.f32.partialorder %v407, 0.0
        %vm507 = vcmp.ge.f32.partialorder %v409, 0.0
        %vm508 = vcmp.ge.f32.partialorder %v490, 0.0
        %vm509 = vcmp.ge.f32.partialorder %v492, 0.0
        %vm510 = vcmp.ge.f32.partialorder %v413, 0.0
        %vm511 = vcmp.ge.f32.partialorder %v415, 0.0
        %vm512 = vcmp.ge.f32.partialorder %v496, 0.0
        %vm513 = vcmp.ge.f32.partialorder %v498, 0.0
        %vm514 = vcmp.ge.f32.partialorder %v419, 0.0
        %vm515 = vcmp.ge.f32.partialorder %v421, 0.0
        %vm516 = vcmp.ge.f32.partialorder %v502, 0.0
        %vm517 = vcmp.ge.f32.partialorder %v504, 0.0
        %v518 = vmul.f32 %v407, 0.003
        %v519 = vmul.f32 %v409, 0.003
        %v520 = vmul.f32 %v490, 0.003
        %v521 = vmul.f32 %v492, 0.003
        %v522 = vmul.f32 %v413, 0.003
        %v523 = vmul.f32 %v415, 0.003
        %v524 = vmul.f32 %v496, 0.003
        %v525 = vmul.f32 %v498, 0.003
        %v526 = vmul.f32 %v419, 0.003
        %v527 = vmul.f32 %v421, 0.003
        %v528 = vmul.f32 %v502, 0.003
        %v529 = vmul.f32 %v504, 0.003
        %v530 = vsel %vm506, %v407, %v518
        %v531 = vsel %vm507, %v409, %v519
        %v532 = vsel %vm508, %v490, %v520
        %v533 = vsel %vm509, %v492, %v521
        %v534 = vsel %vm510, %v413, %v522
        %v535 = vsel %vm511, %v415, %v523
        %v536 = vsel %vm512, %v496, %v524
        %v537 = vsel %vm513, %v498, %v525
        %v538 = vsel %vm514, %v419, %v526
        %v539 = vsel %vm515, %v421, %v527
        %v540 = vsel %vm516, %v502, %v528
        %v541 = vsel %vm517, %v504, %v529
        %542 = vst [vmem:[%s259] sm:$0xff] %v530
        %543 = vst [vmem:[%s259 + $0x8] sm:$0xff] %v531
        %544 = vst [vmem:[%s259 + $0x10] sm:$0xff] %v532
        %545 = vst [vmem:[%s259 + $0x18] sm:$0xff] %v533
        %546 = vst [vmem:[%s259 + $0x20] sm:$0xff] %v534
        %547 = vst [vmem:[%s259 + $0x28] sm:$0xff] %v535
        %548 = vst [vmem:[%s259 + $0x30] sm:$0xff] %v536
        %549 = vst [vmem:[%s259 + $0x38] sm:$0xff] %v537
        %550 = vst [vmem:[%s259 + $0x40] sm:$0xff] %v538
        %551 = vst [vmem:[%s259 + $0x48] sm:$0xff] %v539
        %552 = vst [vmem:[%s259 + $0x50] sm:$0xff] %v540
        %553 = vst [vmem:[%s259 + $0x58] sm:$0xff] %v541
        %s554 = sand.u32 %s68, 1
        %s555 = sand.u32 %s68, 1
        %s556 = smul.addr %s555, 96
        %s557 = scalar_lea.vmem [#allocation3], %s556
        // Predicated region
        $region52: #{mjonet_forward.6} parent=46 // pred_check
          %p558 = pneg %p78
        $region53: #{mjonet_forward.6} parent=46 // pred_check_branch
          %560 = sbr.rel (%p558) target = $region55
        $region54: #{mjonet_forward.6} parent=46 // pred_region
          %s561 = smul.u32 4, %s13
          %s562 = smul.addr %s561, 8
          %s563 = scalar_lea.vmem %s2, %s562
          // Predicated region
          $region56: #{mjonet_forward.6} parent=54 // pred_check
            _
          $region57: #{mjonet_forward.6} parent=54 // pred_check_branch
            %565 = sbr.rel (0) target = $region59
          $region58: #{mjonet_forward.6} parent=54 // pred_region
            // Predicated region
            $region60: #{mjonet_forward.6} parent=58 // pred_check
              _
            $region61: #{mjonet_forward.6} parent=58 // pred_check_branch
              %567 = sbr.rel (0) target = $region63
            $region62: #{mjonet_forward.6} parent=58 // pred_region
              loop: start=0, step=1, limit=1
              $region64: #{mjonet_forward.6} parent=62 // loop_pre_header
                _
              $region65: #{mjonet_forward.6} parent=62 // loop_header
                %s569 = sphi 0, %s573
                %p570 = scmp.ge.s32.totalorder %s569, 1
                %s574 = sphi %s557, %s557
                %s575 = sphi %s563, %s563
              $region66: #{mjonet_forward.6} parent=62 // loop_header_branch
                %572 = sbr.rel (%p570) target = $region70
              $region67: #{mjonet_forward.6} parent=62 // loop_body
                %v576 = vld [vmem:[%s574] sm:$0xff]
                %577 = vst [vmem:[%s575] sm:$0xff] %v576
                %v578 = vld [vmem:[%s574 + $0x8] sm:$0xff]
                %579 = vst [vmem:[%s575 + $0x8] sm:$0xff] %v578
                %v580 = vld [vmem:[%s574 + $0x10] sm:$0xff]
                %581 = vst [vmem:[%s575 + $0x10] sm:$0xff] %v580
                %v582 = vld [vmem:[%s574 + $0x18] sm:$0xff]
                %583 = vst [vmem:[%s575 + $0x18] sm:$0xff] %v582
                %v584 = vld [vmem:[%s574 + $0x20] sm:$0xff]
                %585 = vst [vmem:[%s575 + $0x40] sm:$0xff] %v584
                %v586 = vld [vmem:[%s574 + $0x28] sm:$0xff]
                %587 = vst [vmem:[%s575 + $0x48] sm:$0xff] %v586
                %v588 = vld [vmem:[%s574 + $0x30] sm:$0xff]
                %589 = vst [vmem:[%s575 + $0x50] sm:$0xff] %v588
                %v590 = vld [vmem:[%s574 + $0x38] sm:$0xff]
                %591 = vst [vmem:[%s575 + $0x58] sm:$0xff] %v590
                %v592 = vld [vmem:[%s574 + $0x40] sm:$0xff]
                %593 = vst [vmem:[%s575 + $0x80] sm:$0xff] %v592
                %v594 = vld [vmem:[%s574 + $0x48] sm:$0xff]
                %595 = vst [vmem:[%s575 + $0x88] sm:$0xff] %v594
                %v596 = vld [vmem:[%s574 + $0x50] sm:$0xff]
                %597 = vst [vmem:[%s575 + $0x90] sm:$0xff] %v596
                %v598 = vld [vmem:[%s574 + $0x58] sm:$0xff]
                %599 = vst [vmem:[%s575 + $0x98] sm:$0xff] %v598
              $region68: #{mjonet_forward.6} parent=62 // loop_footer
                %s573 = sadd.s32 1, %s569
              $region69: #{mjonet_forward.6} parent=62 // loop_footer_branch
                %568 = sbr.rel target = $region65
              $region70: #{mjonet_forward.6} parent=62 // loop_exit
                _
            $region63: #{mjonet_forward.6} parent=58 // pred_fallthru
              _
            // Predicated region
            $region71: #{mjonet_forward.6} parent=58 // pred_check
              _
            $region72: #{mjonet_forward.6} parent=58 // pred_check_branch
              %601 = sbr.rel target = $region74
            $region73: #{mjonet_forward.6} parent=58 // pred_region
              _
            $region74: #{mjonet_forward.6} parent=58 // pred_fallthru
              _
          $region59: #{mjonet_forward.6} parent=54 // pred_fallthru
            _
          %602 = vnop
        $region55: #{mjonet_forward.6} parent=46 // pred_fallthru
          _
      $region47: #{mjonet_forward.6} parent=5 // pred_fallthru
        _
      %p603 = scmp.le.s32.totalorder 2, %s8
      // Predicated region
      $region75: #{mjonet_forward.6} parent=5 // pred_check
        %p604 = pneg %p603
      $region76: #{mjonet_forward.6} parent=5 // pred_check_branch
        %606 = sbr.rel (%p604) target = $region78
      $region77: #{mjonet_forward.6} parent=5 // pred_region
        %s607 = ssub.s32 %s8, 2
        // Predicated region
        $region79: #{mjonet_forward.6} parent=77 // pred_check
          %p608 = pneg %p84
        $region80: #{mjonet_forward.6} parent=77 // pred_check_branch
          %610 = sbr.rel (%p608) target = $region82
        $region81: #{mjonet_forward.6} parent=77 // pred_region
          %s611 = sand.u32 %s69, 1
          %s612 = sand.u32 %s69, 1
          %s613 = smul.addr %s612, 96
          %s614 = scalar_lea.vmem [#allocation3], %s613
        $region82: #{mjonet_forward.6} parent=77 // pred_fallthru
          _
      $region78: #{mjonet_forward.6} parent=5 // pred_fallthru
        _
    $region6: #{mjonet_forward.6} parent=1 // loop_footer
      %s12 = sadd.s32 1, %s8
    $region7: #{mjonet_forward.6} parent=1 // loop_footer_branch
      %7 = sbr.rel target = $region3
    $region8: #{mjonet_forward.6} parent=1 // loop_exit
      _

// kernel: mjonet_forward.7
$region0: #{mjonet_forward.7}
  #allocation0 [shape = 'u32[]', space=smem, size = 0x4, offset = 0x4, fixed_abs, tag = 'smem constant byte address 0x4 - core index']
  #allocation1 [shape = 'u32[144,128]{1,0:T(1,128)}', space=vmem, size = 0x12000, scoped, tag = 'internal scratch']
  %s0 = inlined_call_operand.vmem [shape: f32[9,24,128], index: 0, kind: input, shape index: {}]
  %s1 = inlined_call_operand.vmem [shape: f32[24,128], index: 1, kind: output, shape index: {}]
  %s2 = sld [smem:[#allocation0]]
  $region14: #{mjonet_forward.7} parent=0
    _
  %s4 = ssub.s32 1, %s2
  %s5 = scalar_select 0, %s4, %s2
  // Predicated region
  $region2: #{mjonet_forward.7} parent=0 // pred_check
    _
  $region3: #{mjonet_forward.7} parent=0 // pred_check_branch
    %7 = sbr.rel (0) target = $region5
  $region4: #{mjonet_forward.7} parent=0 // pred_region
    _
  $region5: #{mjonet_forward.7} parent=0 // pred_fallthru
    _
  %v8 = vld [vmem:[%s0] sm:$0xff]
  %v9 = vld [vmem:[%s0 + $0x8] sm:$0xff]
  %v10 = vld [vmem:[%s0 + $0x10] sm:$0xff]
  %v11 = vld [vmem:[%s0 + $0x18] sm:$0xff]
  %v12 = vld [vmem:[%s0 + $0x20] sm:$0xff]
  %v13 = vld [vmem:[%s0 + $0x28] sm:$0xff]
  %v14 = vld [vmem:[%s0 + $0x30] sm:$0xff]
  %v15 = vld [vmem:[%s0 + $0x38] sm:$0xff]
  %v16 = vld [vmem:[%s0 + $0x40] sm:$0xff]
  %v17 = vld [vmem:[%s0 + $0x48] sm:$0xff]
  %v18 = vld [vmem:[%s0 + $0x50] sm:$0xff]
  %v19 = vld [vmem:[%s0 + $0x58] sm:$0xff]
  %v20 = vld [vmem:[%s0 + $0x60] sm:$0xff]
  %v21 = vld [vmem:[%s0 + $0x68] sm:$0xff]
  %v22 = vld [vmem:[%s0 + $0x70] sm:$0xff]
  %v23 = vld [vmem:[%s0 + $0x78] sm:$0xff]
  %v24 = vld [vmem:[%s0 + $0x80] sm:$0xff]
  %v25 = vld [vmem:[%s0 + $0x88] sm:$0xff]
  %v26 = vld [vmem:[%s0 + $0x90] sm:$0xff]
  %v27 = vld [vmem:[%s0 + $0x98] sm:$0xff]
  %v28 = vld [vmem:[%s0 + $0xa0] sm:$0xff]
  %v29 = vld [vmem:[%s0 + $0xa8] sm:$0xff]
  %v30 = vld [vmem:[%s0 + $0xb0] sm:$0xff]
  %v31 = vld [vmem:[%s0 + $0xb8] sm:$0xff]
  %v32 = vld [vmem:[%s0 + $0xc0] sm:$0xff]
  %v33 = vld [vmem:[%s0 + $0xc8] sm:$0xff]
  %v34 = vld [vmem:[%s0 + $0xd0] sm:$0xff]
  %v35 = vadd.f32 %v8, %v11
  %v36 = vadd.f32 %v35, %v14
  %v37 = vadd.f32 %v36, %v17
  %v38 = vadd.f32 %v37, %v20
  %v39 = vadd.f32 %v38, %v23
  %v40 = vadd.f32 %v39, %v26
  %v41 = vadd.f32 %v40, %v29
  %v42 = vadd.f32 %v41, %v32
  %v43 = vadd.f32 %v9, %v12
  %v44 = vadd.f32 %v43, %v15
  %v45 = vadd.f32 %v44, %v18
  %v46 = vadd.f32 %v45, %v21
  %v47 = vadd.f32 %v46, %v24
  %v48 = vadd.f32 %v47, %v27
  %v49 = vadd.f32 %v48, %v30
  %v50 = vadd.f32 %v49, %v33
  %v51 = vadd.f32 %v10, %v13
  %v52 = vadd.f32 %v51, %v16
  %v53 = vadd.f32 %v52, %v19
  %v54 = vadd.f32 %v53, %v22
  %v55 = vadd.f32 %v54, %v25
  %v56 = vadd.f32 %v55, %v28
  %v57 = vadd.f32 %v56, %v31
  %v58 = vadd.f32 %v57, %v34
  %v59 = vmul.f32 %v42, 0.11111111
  %v60 = vmul.f32 %v50, 0.11111111
  %v61 = vmul.f32 %v58, 0.11111111
  %62 = vst [vmem:[%s1] sm:$0xff] %v59
  %63 = vst [vmem:[%s1 + $0x8] sm:$0xff] %v60
  %64 = vst [vmem:[%s1 + $0x10] sm:$0xff] %v61
  // Predicated region
  $region6: #{mjonet_forward.7} parent=0 // pred_check
    _
  $region7: #{mjonet_forward.7} parent=0 // pred_check_branch
    %66 = sbr.rel (0) target = $region9
  $region8: #{mjonet_forward.7} parent=0 // pred_region
    _
  $region9: #{mjonet_forward.7} parent=0 // pred_fallthru
    _
  // Predicated region
  $region10: #{mjonet_forward.7} parent=0 // pred_check
    _
  $region11: #{mjonet_forward.7} parent=0 // pred_check_branch
    %68 = sbr.rel (0) target = $region13
  $region12: #{mjonet_forward.7} parent=0 // pred_region
    _
  $region13: #{mjonet_forward.7} parent=0 // pred_fallthru
    _

// kernel: mjonet_forward.8
$region0: #{mjonet_forward.8}
  #allocation0 [shape = 'u32[]', space=smem, size = 0x4, offset = 0x4, fixed_abs, tag = 'smem constant byte address 0x4 - core index']
  #allocation1 [shape = 'u32[144,128]{1,0:T(1,128)}', space=vmem, size = 0x12000, scoped, tag = 'internal scratch']
  %s0 = inlined_call_operand.vmem [shape: f32[36,600], index: 0, kind: input, shape index: {}]
  %s1 = inlined_call_operand.vmem [shape: f32[600,128], index: 1, kind: input, shape index: {}]
  %s2 = inlined_call_operand.vmem [shape: f32[36,128], index: 2, kind: output, shape index: {}]
  %s3 = sld [smem:[#allocation0]]
  $region18: #{mjonet_forward.8} parent=0
    _
  %s5 = ssub.s32 1, %s3
  %s6 = scalar_select 0, %s5, %s3
  // Predicated region
  $region2: #{mjonet_forward.8} parent=0 // pred_check
    _
  $region3: #{mjonet_forward.8} parent=0 // pred_check_branch
    %8 = sbr.rel (0) target = $region5
  $region4: #{mjonet_forward.8} parent=0 // pred_region
    _
  $region5: #{mjonet_forward.8} parent=0 // pred_fallthru
    _
  // Predicated region
  $region6: #{mjonet_forward.8} parent=0 // pred_check
    _
  $region7: #{mjonet_forward.8} parent=0 // pred_check_branch
    %10 = sbr.rel (0) target = $region9
  $region8: #{mjonet_forward.8} parent=0 // pred_region
    _
  $region9: #{mjonet_forward.8} parent=0 // pred_fallthru
    _
  %v11 = vld [vmem:[%s0] sm:$0xff]
  %v12 = vld [vmem:[%s0 + $0x8] sm:$0xff]
  %v13 = vld [vmem:[%s0 + $0x10] sm:$0xff]
  %v14 = vld [vmem:[%s0 + $0x18] sm:$0xff]
  %v15 = vld [vmem:[%s0 + $0x20] sm:$0xff]
  %v16 = vld [vmem:[%s0 + $0x28] sm:$0xff]
  %v17 = vld [vmem:[%s0 + $0x30] sm:$0xff]
  %v18 = vld [vmem:[%s0 + $0x38] sm:$0xff]
  %v19 = vld [vmem:[%s0 + $0x40] sm:$0xff]
  %v20 = vld [vmem:[%s0 + $0x48] sm:$0xff]
  %v21 = vld [vmem:[%s0 + $0x50] sm:$0xff]
  %v22 = vld [vmem:[%s0 + $0x58] sm:$0xff]
  %v23 = vld [vmem:[%s0 + $0x60] sm:$0xff]
  %v24 = vld [vmem:[%s0 + $0x68] sm:$0xff]
  %v25 = vld [vmem:[%s0 + $0x70] sm:$0xff]
  %v26 = vld [vmem:[%s0 + $0x78] sm:$0xff]
  %v27 = vld [vmem:[%s0 + $0x80] sm:$0xff]
  %v28 = vld [vmem:[%s0 + $0x88] sm:$0xff]
  %v29 = vld [vmem:[%s0 + $0x90] sm:$0xff]
  %v30 = vld [vmem:[%s0 + $0x98] sm:$0xff]
  %v31 = vld [vmem:[%s0 + $0xa0] sm:$0xf]
  %v32 = vld [vmem:[%s0 + $0xa8] sm:$0xf]
  %v33 = vld [vmem:[%s0 + $0xb0] sm:$0xf]
  %v34 = vld [vmem:[%s0 + $0xb8] sm:$0xf]
  %v35 = vld [vmem:[%s0 + $0xc0] sm:$0xf]
  %v36 = vld [vmem:[%s1] sm:$0xff]
  %v37 = vld [vmem:[%s1 + $0x8] sm:$0xff]
  %v38 = vld [vmem:[%s1 + $0x10] sm:$0xff]
  %v39 = vld [vmem:[%s1 + $0x18] sm:$0xff]
  %v40 = vld [vmem:[%s1 + $0x20] sm:$0xff]
  %v41 = vld [vmem:[%s1 + $0x28] sm:$0xff]
  %v42 = vld [vmem:[%s1 + $0x30] sm:$0xff]
  %v43 = vld [vmem:[%s1 + $0x38] sm:$0xff]
  %v44 = vld [vmem:[%s1 + $0x40] sm:$0xff]
  %v45 = vld [vmem:[%s1 + $0x48] sm:$0xff]
  %v46 = vld [vmem:[%s1 + $0x50] sm:$0xff]
  %v47 = vld [vmem:[%s1 + $0x58] sm:$0xff]
  %v48 = vld [vmem:[%s1 + $0x60] sm:$0xff]
  %v49 = vld [vmem:[%s1 + $0x68] sm:$0xff]
  %v50 = vld [vmem:[%s1 + $0x70] sm:$0xff]
  %v51 = vld [vmem:[%s1 + $0x78] sm:$0xff]
  %v52 = vld [vmem:[%s1 + $0x80] sm:$0xff]
  %v53 = vld [vmem:[%s1 + $0x88] sm:$0xff]
  %v54 = vld [vmem:[%s1 + $0x90] sm:$0xff]
  %v55 = vld [vmem:[%s1 + $0x98] sm:$0xff]
  %v56 = vld [vmem:[%s1 + $0xa0] sm:$0xff]
  %v57 = vld [vmem:[%s1 + $0xa8] sm:$0xff]
  %v58 = vld [vmem:[%s1 + $0xb0] sm:$0xff]
  %v59 = vld [vmem:[%s1 + $0xb8] sm:$0xff]
  %v60 = vld [vmem:[%s1 + $0xc0] sm:$0xff]
  %v61 = vld [vmem:[%s1 + $0xc8] sm:$0xff]
  %v62 = vld [vmem:[%s1 + $0xd0] sm:$0xff]
  %v63 = vld [vmem:[%s1 + $0xd8] sm:$0xff]
  %v64 = vld [vmem:[%s1 + $0xe0] sm:$0xff]
  %v65 = vld [vmem:[%s1 + $0xe8] sm:$0xff]
  %v66 = vld [vmem:[%s1 + $0xf0] sm:$0xff]
  %v67 = vld [vmem:[%s1 + $0xf8] sm:$0xff]
  %v68 = vld [vmem:[%s1 + $0x100] sm:$0xff]
  %v69 = vld [vmem:[%s1 + $0x108] sm:$0xff]
  %v70 = vld [vmem:[%s1 + $0x110] sm:$0xff]
  %v71 = vld [vmem:[%s1 + $0x118] sm:$0xff]
  %v72 = vld [vmem:[%s1 + $0x120] sm:$0xff]
  %v73 = vld [vmem:[%s1 + $0x128] sm:$0xff]
  %v74 = vld [vmem:[%s1 + $0x130] sm:$0xff]
  %v75 = vld [vmem:[%s1 + $0x138] sm:$0xff]
  %v76 = vld [vmem:[%s1 + $0x140] sm:$0xff]
  %v77 = vld [vmem:[%s1 + $0x148] sm:$0xff]
  %v78 = vld [vmem:[%s1 + $0x150] sm:$0xff]
  %v79 = vld [vmem:[%s1 + $0x158] sm:$0xff]
  %v80 = vld [vmem:[%s1 + $0x160] sm:$0xff]
  %v81 = vld [vmem:[%s1 + $0x168] sm:$0xff]
  %v82 = vld [vmem:[%s1 + $0x170] sm:$0xff]
  %v83 = vld [vmem:[%s1 + $0x178] sm:$0xff]
  %v84 = vld [vmem:[%s1 + $0x180] sm:$0xff]
  %v85 = vld [vmem:[%s1 + $0x188] sm:$0xff]
  %v86 = vld [vmem:[%s1 + $0x190] sm:$0xff]
  %v87 = vld [vmem:[%s1 + $0x198] sm:$0xff]
  %v88 = vld [vmem:[%s1 + $0x1a0] sm:$0xff]
  %v89 = vld [vmem:[%s1 + $0x1a8] sm:$0xff]
  %v90 = vld [vmem:[%s1 + $0x1b0] sm:$0xff]
  %v91 = vld [vmem:[%s1 + $0x1b8] sm:$0xff]
  %v92 = vld [vmem:[%s1 + $0x1c0] sm:$0xff]
  %v93 = vld [vmem:[%s1 + $0x1c8] sm:$0xff]
  %v94 = vld [vmem:[%s1 + $0x1d0] sm:$0xff]
  %v95 = vld [vmem:[%s1 + $0x1d8] sm:$0xff]
  %v96 = vld [vmem:[%s1 + $0x1e0] sm:$0xff]
  %v97 = vld [vmem:[%s1 + $0x1e8] sm:$0xff]
  %v98 = vld [vmem:[%s1 + $0x1f0] sm:$0xff]
  %v99 = vld [vmem:[%s1 + $0x1f8] sm:$0xff]
  %v100 = vld [vmem:[%s1 + $0x200] sm:$0xff]
  %v101 = vld [vmem:[%s1 + $0x208] sm:$0xff]
  %v102 = vld [vmem:[%s1 + $0x210] sm:$0xff]
  %v103 = vld [vmem:[%s1 + $0x218] sm:$0xff]
  %v104 = vld [vmem:[%s1 + $0x220] sm:$0xff]
  %v105 = vld [vmem:[%s1 + $0x228] sm:$0xff]
  %v106 = vld [vmem:[%s1 + $0x230] sm:$0xff]
  %v107 = vld [vmem:[%s1 + $0x238] sm:$0xff]
  %v108 = vld [vmem:[%s1 + $0x240] sm:$0xff]
  %v109 = vld [vmem:[%s1 + $0x248] sm:$0xff]
  %v110 = vld [vmem:[%s1 + $0x250] sm:$0xff]
  %vm111 = vcmask 719872
  %v113 = vsel %vm111, %v15, 0
  %v116 = vsel %vm111, %v20, 0
  %v119 = vsel %vm111, %v25, 0
  %v122 = vsel %vm111, %v30, 0
  %v125 = vsel %vm111, %v35, 0
  %127 = vmatprep.subr.mxu0 0.0
  %128 = vmatpush1.msra.mxu0 %v36
  %129 = vmatprep.subr.mxu0 0.0
  %130 = vmatpush1.msra.mxu0 %v37
  %131 = vmatprep.subr.mxu0 0.0
  %132 = vmatpush1.msra.mxu0 %v38
  %133 = vmatprep.subr.mxu0 0.0
  %134 = vmatpush1.msra.mxu0 %v39
  %135 = vmatprep.subr.mxu0 0.0
  %136 = vmatpush1.msra.mxu0 %v40
  %137 = vmatprep.subr.mxu0 0.0
  %138 = vmatpush1.msra.mxu0 %v41
  %139 = vmatprep.subr.mxu0 0.0
  %140 = vmatpush1.msra.mxu0 %v42
  %141 = vmatprep.subr.mxu0 0.0
  %142 = vmatpush1.msra.mxu0 %v43
  %143 = vmatprep.subr.mxu0 0.0
  %144 = vmatpush1.msra.mxu0 %v44
  %145 = vmatprep.subr.mxu0 0.0
  %146 = vmatpush1.msra.mxu0 %v45
  %147 = vmatprep.subr.mxu0 0.0
  %148 = vmatpush1.msra.mxu0 %v46
  %149 = vmatprep.subr.mxu0 0.0
  %150 = vmatpush1.msra.mxu0 %v47
  %151 = vmatprep.subr.mxu0 0.0
  %152 = vmatpush1.msra.mxu0 %v48
  %153 = vmatprep.subr.mxu0 0.0
  %154 = vmatpush1.msra.mxu0 %v49
  %155 = vmatprep.subr.mxu0 0.0
  %156 = vmatpush1.msra.mxu0 %v50
  %157 = vmatprep.subr.mxu0 0.0
  %158 = vmatpush1.msra.mxu0 %v51
  %159 = vmatprep.subr.mxu0 0.0
  %160 = vmatpush1.msra.mxu0 %v52
  %161 = vmatprep.subr.mxu0 0.0
  %162 = vmatpush1.msra.mxu0 %v53
  %163 = vmatprep.subr.mxu0 0.0
  %164 = vmatpush1.msra.mxu0 %v54
  %165 = vmatprep.subr.mxu0 0.0
  %166 = vmatpush1.msra.mxu0 %v55
  %167 = vmatprep.subr.mxu0 0.0
  %168 = vmatpush1.msra.mxu0 %v56
  %169 = vmatprep.subr.mxu0 0.0
  %170 = vmatpush1.msra.mxu0 %v57
  %171 = vmatprep.subr.mxu0 0.0
  %172 = vmatpush1.msra.mxu0 %v58
  %173 = vmatprep.subr.mxu0 0.0
  %174 = vmatpush1.msra.mxu0 %v59
  %175 = vmatprep.subr.mxu0 0.0
  %176 = vmatpush1.msra.mxu0 %v60
  %177 = vmatprep.subr.mxu0 0.0
  %178 = vmatpush1.msra.mxu0 %v61
  %179 = vmatprep.subr.mxu0 0.0
  %180 = vmatpush1.msra.mxu0 %v62
  %181 = vmatprep.subr.mxu0 0.0
  %182 = vmatpush1.msra.mxu0 %v63
  %183 = vmatprep.subr.mxu0 0.0
  %184 = vmatpush1.msra.mxu0 %v64
  %185 = vmatprep.subr.mxu0 0.0
  %186 = vmatpush1.msra.mxu0 %v65
  %187 = vmatprep.subr.mxu0 0.0
  %188 = vmatpush1.msra.mxu0 %v66
  %189 = vmatprep.subr.mxu0 0.0
  %190 = vmatpush1.msra.mxu0 %v67
  %191 = vmatprep.mubr.f32.mxu0 %v12
  %192 = vmatmul.mubr.f32.gmra.mrb[0].mxu0 %v11
  %v193 = vpop.f32.mrb[0].mxu0
  %v194 = vadd.f32 0.0, %v193
  %v195 = vpop.f32.mrb[0].mxu0
  %196 = vmatprep.mubr.f32.mxu0 %v17
  %197 = vmatmul.mubr.f32.gmra.mrb[0].mxu0 %v16
  %v198 = vpop.f32.mrb[0].mxu0
  %v199 = vadd.f32 0.0, %v198
  %v200 = vpop.f32.mrb[0].mxu0
  %201 = vmatprep.mubr.f32.mxu0 %v22
  %202 = vmatmul.mubr.f32.gmra.mrb[0].mxu0 %v21
  %v203 = vpop.f32.mrb[0].mxu0
  %v204 = vadd.f32 0.0, %v203
  %v205 = vpop.f32.mrb[0].mxu0
  %206 = vmatprep.mubr.f32.mxu0 %v27
  %207 = vmatmul.mubr.f32.gmra.mrb[0].mxu0 %v26
  %v208 = vpop.f32.mrb[0].mxu0
  %v209 = vadd.f32 0.0, %v208
  %v210 = vpop.f32.mrb[0].mxu0
  %211 = vmatprep.mubr.f32.mxu0 %v32
  %212 = vmatmul.mubr.f32.gmra.mrb[0].mxu0 %v31
  %v213 = vpop.f32.mrb[0].mxu0
  %v214 = vadd.f32 0.0, %v213
  %v215 = vpop.f32.mrb[0].mxu0
  %216 = vdwg.mxu0
  %217 = vmatprep.subr.mxu0 0.0
  %218 = vmatpush1.msra.mxu0 %v68
  %219 = vmatprep.subr.mxu0 0.0
  %220 = vmatpush1.msra.mxu0 %v69
  %221 = vmatprep.subr.mxu0 0.0
  %222 = vmatpush1.msra.mxu0 %v70
  %223 = vmatprep.subr.mxu0 0.0
  %224 = vmatpush1.msra.mxu0 %v71
  %225 = vmatprep.subr.mxu0 0.0
  %226 = vmatpush1.msra.mxu0 %v72
  %227 = vmatprep.subr.mxu0 0.0
  %228 = vmatpush1.msra.mxu0 %v73
  %229 = vmatprep.subr.mxu0 0.0
  %230 = vmatpush1.msra.mxu0 %v74
  %231 = vmatprep.subr.mxu0 0.0
  %232 = vmatpush1.msra.mxu0 %v75
  %233 = vmatprep.subr.mxu0 0.0
  %234 = vmatpush1.msra.mxu0 %v76
  %235 = vmatprep.subr.mxu0 0.0
  %236 = vmatpush1.msra.mxu0 %v77
  %237 = vmatprep.subr.mxu0 0.0
  %238 = vmatpush1.msra.mxu0 %v78
  %239 = vmatprep.subr.mxu0 0.0
  %240 = vmatpush1.msra.mxu0 %v79
  %241 = vmatprep.subr.mxu0 0.0
  %242 = vmatpush1.msra.mxu0 %v80
  %243 = vmatprep.subr.mxu0 0.0
  %244 = vmatpush1.msra.mxu0 %v81
  %245 = vmatprep.subr.mxu0 0.0
  %246 = vmatpush1.msra.mxu0 %v82
  %247 = vmatprep.subr.mxu0 0.0
  %248 = vmatpush1.msra.mxu0 %v83
  %249 = vmatprep.subr.mxu0 0.0
  %250 = vmatpush1.msra.mxu0 %v84
  %251 = vmatprep.subr.mxu0 0.0
  %252 = vmatpush1.msra.mxu0 %v85
  %253 = vmatprep.subr.mxu0 0.0
  %254 = vmatpush1.msra.mxu0 %v86
  %255 = vmatprep.subr.mxu0 0.0
  %256 = vmatpush1.msra.mxu0 %v87
  %257 = vmatprep.subr.mxu0 0.0
  %258 = vmatpush1.msra.mxu0 %v88
  %259 = vmatprep.subr.mxu0 0.0
  %260 = vmatpush1.msra.mxu0 %v89
  %261 = vmatprep.subr.mxu0 0.0
  %262 = vmatpush1.msra.mxu0 %v90
  %263 = vmatprep.subr.mxu0 0.0
  %264 = vmatpush1.msra.mxu0 %v91
  %265 = vmatprep.subr.mxu0 0.0
  %266 = vmatpush1.msra.mxu0 %v92
  %267 = vmatprep.subr.mxu0 0.0
  %268 = vmatpush1.msra.mxu0 %v93
  %269 = vmatprep.subr.mxu0 0.0
  %270 = vmatpush1.msra.mxu0 %v94
  %271 = vmatprep.subr.mxu0 0.0
  %272 = vmatpush1.msra.mxu0 %v95
  %273 = vmatprep.subr.mxu0 0.0
  %274 = vmatpush1.msra.mxu0 %v96
  %275 = vmatprep.subr.mxu0 0.0
  %276 = vmatpush1.msra.mxu0 %v97
  %277 = vmatprep.subr.mxu0 0.0
  %278 = vmatpush1.msra.mxu0 %v98
  %279 = vmatprep.subr.mxu0 0.0
  %280 = vmatpush1.msra.mxu0 %v99
  %281 = vmatprep.mubr.f32.mxu0 %v14
  %282 = vmatmul.mubr.f32.gmra.mrb[0].mxu0 %v13
  %v283 = vpop.f32.mrb[0].mxu0
  %v284 = vadd.f32 %v194, %v283
  %v285 = vpop.f32.mrb[0].mxu0
  %286 = vmatprep.mubr.f32.mxu0 %v19
  %287 = vmatmul.mubr.f32.gmra.mrb[0].mxu0 %v18
  %v288 = vpop.f32.mrb[0].mxu0
  %v289 = vadd.f32 %v199, %v288
  %v290 = vpop.f32.mrb[0].mxu0
  %291 = vmatprep.mubr.f32.mxu0 %v24
  %292 = vmatmul.mubr.f32.gmra.mrb[0].mxu0 %v23
  %v293 = vpop.f32.mrb[0].mxu0
  %v294 = vadd.f32 %v204, %v293
  %v295 = vpop.f32.mrb[0].mxu0
  %296 = vmatprep.mubr.f32.mxu0 %v29
  %297 = vmatmul.mubr.f32.gmra.mrb[0].mxu0 %v28
  %v298 = vpop.f32.mrb[0].mxu0
  %v299 = vadd.f32 %v209, %v298
  %v300 = vpop.f32.mrb[0].mxu0
  %301 = vmatprep.mubr.f32.mxu0 %v34
  %302 = vmatmul.mubr.f32.gmra.mrb[0].mxu0 %v33
  %v303 = vpop.f32.mrb[0].mxu0
  %v304 = vadd.f32 %v214, %v303
  %v305 = vpop.f32.mrb[0].mxu0
  %306 = vdwg.mxu0
  %307 = vmatprep.subr.mxu0 0.0
  %308 = vmatpush1.msra.mxu0 %v100
  %309 = vmatprep.subr.mxu0 0.0
  %310 = vmatpush1.msra.mxu0 %v101
  %311 = vmatprep.subr.mxu0 0.0
  %312 = vmatpush1.msra.mxu0 %v102
  %313 = vmatprep.subr.mxu0 0.0
  %314 = vmatpush1.msra.mxu0 %v103
  %315 = vmatprep.subr.mxu0 0.0
  %316 = vmatpush1.msra.mxu0 %v104
  %317 = vmatprep.subr.mxu0 0.0
  %318 = vmatpush1.msra.mxu0 %v105
  %319 = vmatprep.subr.mxu0 0.0
  %320 = vmatpush1.msra.mxu0 %v106
  %321 = vmatprep.subr.mxu0 0.0
  %322 = vmatpush1.msra.mxu0 %v107
  %323 = vmatprep.subr.mxu0 0.0
  %324 = vmatpush1.msra.mxu0 %v108
  %325 = vmatprep.subr.mxu0 0.0
  %326 = vmatpush1.msra.mxu0 %v109
  %327 = vmatprep.subr.mxu0 0.0
  %328 = vmatpush1.msra.mxu0 %v110
  %329 = vmatprep.subr.mxu0 0.0
  %330 = vmatpush1.msra.mxu0 0.0
  %331 = vmatprep.subr.mxu0 0.0
  %332 = vmatpush1.msra.mxu0 0.0
  %333 = vmatprep.subr.mxu0 0.0
  %334 = vmatpush1.msra.mxu0 0.0
  %335 = vmatprep.subr.mxu0 0.0
  %336 = vmatpush1.msra.mxu0 0.0
  %337 = vmatprep.subr.mxu0 0.0
  %338 = vmatpush1.msra.mxu0 0.0
  %339 = vmatprep.subr.mxu0 0.0
  %340 = vmatpush1.msra.mxu0 0.0
  %341 = vmatprep.subr.mxu0 0.0
  %342 = vmatpush1.msra.mxu0 0.0
  %343 = vmatprep.subr.mxu0 0.0
  %344 = vmatpush1.msra.mxu0 0.0
  %345 = vmatprep.subr.mxu0 0.0
  %346 = vmatpush1.msra.mxu0 0.0
  %347 = vmatprep.subr.mxu0 0.0
  %348 = vmatpush1.msra.mxu0 0.0
  %349 = vmatprep.subr.mxu0 0.0
  %350 = vmatpush1.msra.mxu0 0.0
  %351 = vmatprep.subr.mxu0 0.0
  %352 = vmatpush1.msra.mxu0 0.0
  %353 = vmatprep.subr.mxu0 0.0
  %354 = vmatpush1.msra.mxu0 0.0
  %355 = vmatprep.subr.mxu0 0.0
  %356 = vmatpush1.msra.mxu0 0.0
  %357 = vmatprep.subr.mxu0 0.0
  %358 = vmatpush1.msra.mxu0 0.0
  %359 = vmatprep.subr.mxu0 0.0
  %360 = vmatpush1.msra.mxu0 0.0
  %361 = vmatprep.subr.mxu0 0.0
  %362 = vmatpush1.msra.mxu0 0.0
  %363 = vmatprep.subr.mxu0 0.0
  %364 = vmatpush1.msra.mxu0 0.0
  %365 = vmatprep.subr.mxu0 0.0
  %366 = vmatpush1.msra.mxu0 0.0
  %367 = vmatprep.subr.mxu0 0.0
  %368 = vmatpush1.msra.mxu0 0.0
  %369 = vmatprep.subr.mxu0 0.0
  %370 = vmatpush1.msra.mxu0 0.0
  %371 = vmatprep.mubr.f32.mxu0 0.0
  %372 = vmatmul.mubr.f32.gmra.mrb[0].mxu0 %v113
  %v373 = vpop.f32.mrb[0].mxu0
  %v374 = vadd.f32 %v284, %v373
  %v375 = vpop.f32.mrb[0].mxu0
  %376 = vmatprep.mubr.f32.mxu0 0.0
  %377 = vmatmul.mubr.f32.gmra.mrb[0].mxu0 %v116
  %v378 = vpop.f32.mrb[0].mxu0
  %v379 = vadd.f32 %v289, %v378
  %v380 = vpop.f32.mrb[0].mxu0
  %381 = vmatprep.mubr.f32.mxu0 0.0
  %382 = vmatmul.mubr.f32.gmra.mrb[0].mxu0 %v119
  %v383 = vpop.f32.mrb[0].mxu0
  %v384 = vadd.f32 %v294, %v383
  %v385 = vpop.f32.mrb[0].mxu0
  %386 = vmatprep.mubr.f32.mxu0 0.0
  %387 = vmatmul.mubr.f32.gmra.mrb[0].mxu0 %v122
  %v388 = vpop.f32.mrb[0].mxu0
  %v389 = vadd.f32 %v299, %v388
  %v390 = vpop.f32.mrb[0].mxu0
  %391 = vmatprep.mubr.f32.mxu0 0.0
  %392 = vmatmul.mubr.f32.gmra.mrb[0].mxu0 %v125
  %v393 = vpop.f32.mrb[0].mxu0
  %v394 = vadd.f32 %v304, %v393
  %v395 = vpop.f32.mrb[0].mxu0
  %396 = vdwg.mxu0
  %vm397 = vcmp.ge.f32.partialorder %v374, 0.0
  %vm398 = vcmp.ge.f32.partialorder %v379, 0.0
  %vm399 = vcmp.ge.f32.partialorder %v384, 0.0
  %vm400 = vcmp.ge.f32.partialorder %v389, 0.0
  %vm401 = vcmp.ge.f32.partialorder %v394, 0.0
  %v402 = vmul.f32 %v374, 0.003
  %v403 = vmul.f32 %v379, 0.003
  %v404 = vmul.f32 %v384, 0.003
  %v405 = vmul.f32 %v389, 0.003
  %v406 = vmul.f32 %v394, 0.003
  %v407 = vsel %vm397, %v374, %v402
  %v408 = vsel %vm398, %v379, %v403
  %v409 = vsel %vm399, %v384, %v404
  %v410 = vsel %vm400, %v389, %v405
  %v411 = vsel %vm401, %v394, %v406
  %412 = vst [vmem:[%s2] sm:$0xff] %v407
  %413 = vst [vmem:[%s2 + $0x8] sm:$0xff] %v408
  %414 = vst [vmem:[%s2 + $0x10] sm:$0xff] %v409
  %415 = vst [vmem:[%s2 + $0x18] sm:$0xff] %v410
  %416 = vst [vmem:[%s2 + $0x20] sm:$0xf] %v411
  // Predicated region
  $region10: #{mjonet_forward.8} parent=0 // pred_check
    _
  $region11: #{mjonet_forward.8} parent=0 // pred_check_branch
    %418 = sbr.rel (0) target = $region13
  $region12: #{mjonet_forward.8} parent=0 // pred_region
    _
  $region13: #{mjonet_forward.8} parent=0 // pred_fallthru
    _
  // Predicated region
  $region14: #{mjonet_forward.8} parent=0 // pred_check
    _
  $region15: #{mjonet_forward.8} parent=0 // pred_check_branch
    %420 = sbr.rel (0) target = $region17
  $region16: #{mjonet_forward.8} parent=0 // pred_region
    _
  $region17: #{mjonet_forward.8} parent=0 // pred_fallthru
    _

// kernel: mjonet_forward.9
$region0: #{mjonet_forward.9}
  #allocation0 [shape = 'u32[]', space=smem, size = 0x4, offset = 0x4, fixed_abs, tag = 'smem constant byte address 0x4 - core index']
  #allocation1 [shape = 'u32[144,128]{1,0:T(1,128)}', space=vmem, size = 0x12000, scoped, tag = 'internal scratch']
  %s0 = inlined_call_operand.vmem [shape: f32[9,36,128], index: 0, kind: input, shape index: {}]
  %s1 = inlined_call_operand.vmem [shape: f32[36,128], index: 1, kind: output, shape index: {}]
  %s2 = sld [smem:[#allocation0]]
  $region14: #{mjonet_forward.9} parent=0
    _
  %s4 = ssub.s32 1, %s2
  %s5 = scalar_select 0, %s4, %s2
  // Predicated region
  $region2: #{mjonet_forward.9} parent=0 // pred_check
    _
  $region3: #{mjonet_forward.9} parent=0 // pred_check_branch
    %7 = sbr.rel (0) target = $region5
  $region4: #{mjonet_forward.9} parent=0 // pred_region
    _
  $region5: #{mjonet_forward.9} parent=0 // pred_fallthru
    _
  %v8 = vld [vmem:[%s0] sm:$0xff]
  %v9 = vld [vmem:[%s0 + $0x8] sm:$0xff]
  %v10 = vld [vmem:[%s0 + $0x10] sm:$0xff]
  %v11 = vld [vmem:[%s0 + $0x18] sm:$0xff]
  %v12 = vld [vmem:[%s0 + $0x20] sm:$0xf]
  %v13 = vld [vmem:[%s0 + $0x28] sm:$0xff]
  %v14 = vld [vmem:[%s0 + $0x30] sm:$0xff]
  %v15 = vld [vmem:[%s0 + $0x38] sm:$0xff]
  %v16 = vld [vmem:[%s0 + $0x40] sm:$0xff]
  %v17 = vld [vmem:[%s0 + $0x48] sm:$0xf]
  %v18 = vld [vmem:[%s0 + $0x50] sm:$0xff]
  %v19 = vld [vmem:[%s0 + $0x58] sm:$0xff]
  %v20 = vld [vmem:[%s0 + $0x60] sm:$0xff]
  %v21 = vld [vmem:[%s0 + $0x68] sm:$0xff]
  %v22 = vld [vmem:[%s0 + $0x70] sm:$0xf]
  %v23 = vld [vmem:[%s0 + $0x78] sm:$0xff]
  %v24 = vld [vmem:[%s0 + $0x80] sm:$0xff]
  %v25 = vld [vmem:[%s0 + $0x88] sm:$0xff]
  %v26 = vld [vmem:[%s0 + $0x90] sm:$0xff]
  %v27 = vld [vmem:[%s0 + $0x98] sm:$0xf]
  %v28 = vld [vmem:[%s0 + $0xa0] sm:$0xff]
  %v29 = vld [vmem:[%s0 + $0xa8] sm:$0xff]
  %v30 = vld [vmem:[%s0 + $0xb0] sm:$0xff]
  %v31 = vld [vmem:[%s0 + $0xb8] sm:$0xff]
  %v32 = vld [vmem:[%s0 + $0xc0] sm:$0xf]
  %v33 = vld [vmem:[%s0 + $0xc8] sm:$0xff]
  %v34 = vld [vmem:[%s0 + $0xd0] sm:$0xff]
  %v35 = vld [vmem:[%s0 + $0xd8] sm:$0xff]
  %v36 = vld [vmem:[%s0 + $0xe0] sm:$0xff]
  %v37 = vld [vmem:[%s0 + $0xe8] sm:$0xf]
  %v38 = vld [vmem:[%s0 + $0xf0] sm:$0xff]
  %v39 = vld [vmem:[%s0 + $0xf8] sm:$0xff]
  %v40 = vld [vmem:[%s0 + $0x100] sm:$0xff]
  %v41 = vld [vmem:[%s0 + $0x108] sm:$0xff]
  %v42 = vld [vmem:[%s0 + $0x110] sm:$0xf]
  %v43 = vld [vmem:[%s0 + $0x118] sm:$0xff]
  %v44 = vld [vmem:[%s0 + $0x120] sm:$0xff]
  %v45 = vld [vmem:[%s0 + $0x128] sm:$0xff]
  %v46 = vld [vmem:[%s0 + $0x130] sm:$0xff]
  %v47 = vld [vmem:[%s0 + $0x138] sm:$0xf]
  %v48 = vld [vmem:[%s0 + $0x140] sm:$0xff]
  %v49 = vld [vmem:[%s0 + $0x148] sm:$0xff]
  %v50 = vld [vmem:[%s0 + $0x150] sm:$0xff]
  %v51 = vld [vmem:[%s0 + $0x158] sm:$0xff]
  %v52 = vld [vmem:[%s0 + $0x160] sm:$0xf]
  %v53 = vadd.f32 %v8, %v13
  %v54 = vadd.f32 %v53, %v18
  %v55 = vadd.f32 %v54, %v23
  %v56 = vadd.f32 %v55, %v28
  %v57 = vadd.f32 %v56, %v33
  %v58 = vadd.f32 %v57, %v38
  %v59 = vadd.f32 %v58, %v43
  %v60 = vadd.f32 %v59, %v48
  %v61 = vadd.f32 %v9, %v14
  %v62 = vadd.f32 %v61, %v19
  %v63 = vadd.f32 %v62, %v24
  %v64 = vadd.f32 %v63, %v29
  %v65 = vadd.f32 %v64, %v34
  %v66 = vadd.f32 %v65, %v39
  %v67 = vadd.f32 %v66, %v44
  %v68 = vadd.f32 %v67, %v49
  %v69 = vadd.f32 %v10, %v15
  %v70 = vadd.f32 %v69, %v20
  %v71 = vadd.f32 %v70, %v25
  %v72 = vadd.f32 %v71, %v30
  %v73 = vadd.f32 %v72, %v35
  %v74 = vadd.f32 %v73, %v40
  %v75 = vadd.f32 %v74, %v45
  %v76 = vadd.f32 %v75, %v50
  %v77 = vadd.f32 %v11, %v16
  %v78 = vadd.f32 %v77, %v21
  %v79 = vadd.f32 %v78, %v26
  %v80 = vadd.f32 %v79, %v31
  %v81 = vadd.f32 %v80, %v36
  %v82 = vadd.f32 %v81, %v41
  %v83 = vadd.f32 %v82, %v46
  %v84 = vadd.f32 %v83, %v51
  %vm85 = vcmask 1043456
  %v86 = vsel %vm85, %v12, 0.0
  %v87 = vsel %vm85, %v17, 0.0
  %v88 = vadd.f32 %v86, %v87
  %v89 = vsel %vm85, %v22, 0.0
  %v90 = vadd.f32 %v88, %v89
  %v91 = vsel %vm85, %v27, 0.0
  %v92 = vadd.f32 %v90, %v91
  %v93 = vsel %vm85, %v32, 0.0
  %v94 = vadd.f32 %v92, %v93
  %v95 = vsel %vm85, %v37, 0.0
  %v96 = vadd.f32 %v94, %v95
  %v97 = vsel %vm85, %v42, 0.0
  %v98 = vadd.f32 %v96, %v97
  %v99 = vsel %vm85, %v47, 0.0
  %v100 = vadd.f32 %v98, %v99
  %v101 = vsel %vm85, %v52, 0.0
  %v102 = vadd.f32 %v100, %v101
  %v103 = vmul.f32 %v60, 0.11111111
  %v104 = vmul.f32 %v68, 0.11111111
  %v105 = vmul.f32 %v76, 0.11111111
  %v106 = vmul.f32 %v84, 0.11111111
  %v107 = vmul.f32 %v102, 0.11111111
  %108 = vst [vmem:[%s1] sm:$0xff] %v103
  %109 = vst [vmem:[%s1 + $0x8] sm:$0xff] %v104
  %110 = vst [vmem:[%s1 + $0x10] sm:$0xff] %v105
  %111 = vst [vmem:[%s1 + $0x18] sm:$0xff] %v106
  %112 = vst [vmem:[%s1 + $0x20] sm:$0xf] %v107
  // Predicated region
  $region6: #{mjonet_forward.9} parent=0 // pred_check
    _
  $region7: #{mjonet_forward.9} parent=0 // pred_check_branch
    %114 = sbr.rel (0) target = $region9
  $region8: #{mjonet_forward.9} parent=0 // pred_region
    _
  $region9: #{mjonet_forward.9} parent=0 // pred_fallthru
    _
  // Predicated region
  $region10: #{mjonet_forward.9} parent=0 // pred_check
    _
  $region11: #{mjonet_forward.9} parent=0 // pred_check_branch
    %116 = sbr.rel (0) target = $region13
  $region12: #{mjonet_forward.9} parent=0 // pred_region
    _
  $region13: #{mjonet_forward.9} parent=0 // pred_fallthru
    _

// kernel: mjonet_forward.10
$region0: #{mjonet_forward.10}
  #allocation0 [shape = 'u32[]', space=smem, size = 0x4, offset = 0x4, fixed_abs, tag = 'smem constant byte address 0x4 - core index']
  #allocation1 [shape = 'u32[144,128]{1,0:T(1,128)}', space=vmem, size = 0x12000, scoped, tag = 'internal scratch']
  %s0 = inlined_call_operand.vmem [shape: f32[54,324], index: 0, kind: input, shape index: {}]
  %s1 = inlined_call_operand.vmem [shape: f32[324,128], index: 1, kind: input, shape index: {}]
  %s2 = inlined_call_operand.vmem [shape: f32[54,128], index: 2, kind: output, shape index: {}]
  %s3 = sld [smem:[#allocation0]]
  $region18: #{mjonet_forward.10} parent=0
    _
  %s5 = ssub.s32 1, %s3
  %s6 = scalar_select 0, %s5, %s3
  // Predicated region
  $region2: #{mjonet_forward.10} parent=0 // pred_check
    _
  $region3: #{mjonet_forward.10} parent=0 // pred_check_branch
    %8 = sbr.rel (0) target = $region5
  $region4: #{mjonet_forward.10} parent=0 // pred_region
    _
  $region5: #{mjonet_forward.10} parent=0 // pred_fallthru
    _
  // Predicated region
  $region6: #{mjonet_forward.10} parent=0 // pred_check
    _
  $region7: #{mjonet_forward.10} parent=0 // pred_check_branch
    %10 = sbr.rel (0) target = $region9
  $region8: #{mjonet_forward.10} parent=0 // pred_region
    _
  $region9: #{mjonet_forward.10} parent=0 // pred_fallthru
    _
  %v11 = vld [vmem:[%s0] sm:$0xff]
  %v12 = vld [vmem:[%s0 + $0x8] sm:$0xff]
  %v13 = vld [vmem:[%s0 + $0x10] sm:$0xff]
  %v14 = vld [vmem:[%s0 + $0x18] sm:$0xff]
  %v15 = vld [vmem:[%s0 + $0x20] sm:$0xff]
  %v16 = vld [vmem:[%s0 + $0x28] sm:$0xff]
  %v17 = vld [vmem:[%s0 + $0x30] sm:$0xff]
  %v18 = vld [vmem:[%s0 + $0x38] sm:$0xff]
  %v19 = vld [vmem:[%s0 + $0x40] sm:$0xff]
  %v20 = vld [vmem:[%s0 + $0x48] sm:$0xff]
  %v21 = vld [vmem:[%s0 + $0x50] sm:$0xff]
  %v22 = vld [vmem:[%s0 + $0x58] sm:$0xff]
  %v23 = vld [vmem:[%s0 + $0x60] sm:$0xff]
  %v24 = vld [vmem:[%s0 + $0x68] sm:$0xff]
  %v25 = vld [vmem:[%s0 + $0x70] sm:$0xff]
  %v26 = vld [vmem:[%s0 + $0x78] sm:$0xff]
  %v27 = vld [vmem:[%s0 + $0x80] sm:$0xff]
  %v28 = vld [vmem:[%s0 + $0x88] sm:$0xff]
  %v29 = vld [vmem:[%s0 + $0x90] sm:$0x3f]
  %v30 = vld [vmem:[%s0 + $0x98] sm:$0x3f]
  %v31 = vld [vmem:[%s0 + $0xa0] sm:$0x3f]
  %v32 = vld [vmem:[%s1] sm:$0xff]
  %v33 = vld [vmem:[%s1 + $0x8] sm:$0xff]
  %v34 = vld [vmem:[%s1 + $0x10] sm:$0xff]
  %v35 = vld [vmem:[%s1 + $0x18] sm:$0xff]
  %v36 = vld [vmem:[%s1 + $0x20] sm:$0xff]
  %v37 = vld [vmem:[%s1 + $0x28] sm:$0xff]
  %v38 = vld [vmem:[%s1 + $0x30] sm:$0xff]
  %v39 = vld [vmem:[%s1 + $0x38] sm:$0xff]
  %v40 = vld [vmem:[%s1 + $0x40] sm:$0xff]
  %v41 = vld [vmem:[%s1 + $0x48] sm:$0xff]
  %v42 = vld [vmem:[%s1 + $0x50] sm:$0xff]
  %v43 = vld [vmem:[%s1 + $0x58] sm:$0xff]
  %v44 = vld [vmem:[%s1 + $0x60] sm:$0xff]
  %v45 = vld [vmem:[%s1 + $0x68] sm:$0xff]
  %v46 = vld [vmem:[%s1 + $0x70] sm:$0xff]
  %v47 = vld [vmem:[%s1 + $0x78] sm:$0xff]
  %v48 = vld [vmem:[%s1 + $0x80] sm:$0xff]
  %v49 = vld [vmem:[%s1 + $0x88] sm:$0xff]
  %v50 = vld [vmem:[%s1 + $0x90] sm:$0xff]
  %v51 = vld [vmem:[%s1 + $0x98] sm:$0xff]
  %v52 = vld [vmem:[%s1 + $0xa0] sm:$0xff]
  %v53 = vld [vmem:[%s1 + $0xa8] sm:$0xff]
  %v54 = vld [vmem:[%s1 + $0xb0] sm:$0xff]
  %v55 = vld [vmem:[%s1 + $0xb8] sm:$0xff]
  %v56 = vld [vmem:[%s1 + $0xc0] sm:$0xff]
  %v57 = vld [vmem:[%s1 + $0xc8] sm:$0xff]
  %v58 = vld [vmem:[%s1 + $0xd0] sm:$0xff]
  %v59 = vld [vmem:[%s1 + $0xd8] sm:$0xff]
  %v60 = vld [vmem:[%s1 + $0xe0] sm:$0xff]
  %v61 = vld [vmem:[%s1 + $0xe8] sm:$0xff]
  %v62 = vld [vmem:[%s1 + $0xf0] sm:$0xff]
  %v63 = vld [vmem:[%s1 + $0xf8] sm:$0xff]
  %v64 = vld [vmem:[%s1 + $0x100] sm:$0xff]
  %v65 = vld [vmem:[%s1 + $0x108] sm:$0xff]
  %v66 = vld [vmem:[%s1 + $0x110] sm:$0xff]
  %v67 = vld [vmem:[%s1 + $0x118] sm:$0xff]
  %v68 = vld [vmem:[%s1 + $0x120] sm:$0xff]
  %v69 = vld [vmem:[%s1 + $0x128] sm:$0xff]
  %v70 = vld [vmem:[%s1 + $0x130] sm:$0xff]
  %v71 = vld [vmem:[%s1 + $0x138] sm:$0xff]
  %v72 = vld [vmem:[%s1 + $0x140] sm:$0xf]
  %vm73 = vcmask 556032
  %v75 = vsel %vm73, %v13, 0
  %v78 = vsel %vm73, %v16, 0
  %v81 = vsel %vm73, %v19, 0
  %v84 = vsel %vm73, %v22, 0
  %v87 = vsel %vm73, %v25, 0
  %v90 = vsel %vm73, %v28, 0
  %v93 = vsel %vm73, %v31, 0
  %vm95 = vcmask 1043456
  %v97 = vsel %vm95, %v72, 0
  %99 = vmatprep.subr.mxu0 0.0
  %100 = vmatpush1.msra.mxu0 %v32
  %101 = vmatprep.subr.mxu0 0.0
  %102 = vmatpush1.msra.mxu0 %v33
  %103 = vmatprep.subr.mxu0 0.0
  %104 = vmatpush1.msra.mxu0 %v34
  %105 = vmatprep.subr.mxu0 0.0
  %106 = vmatpush1.msra.mxu0 %v35
  %107 = vmatprep.subr.mxu0 0.0
  %108 = vmatpush1.msra.mxu0 %v36
  %109 = vmatprep.subr.mxu0 0.0
  %110 = vmatpush1.msra.mxu0 %v37
  %111 = vmatprep.subr.mxu0 0.0
  %112 = vmatpush1.msra.mxu0 %v38
  %113 = vmatprep.subr.mxu0 0.0
  %114 = vmatpush1.msra.mxu0 %v39
  %115 = vmatprep.subr.mxu0 0.0
  %116 = vmatpush1.msra.mxu0 %v40
  %117 = vmatprep.subr.mxu0 0.0
  %118 = vmatpush1.msra.mxu0 %v41
  %119 = vmatprep.subr.mxu0 0.0
  %120 = vmatpush1.msra.mxu0 %v42
  %121 = vmatprep.subr.mxu0 0.0
  %122 = vmatpush1.msra.mxu0 %v43
  %123 = vmatprep.subr.mxu0 0.0
  %124 = vmatpush1.msra.mxu0 %v44
  %125 = vmatprep.subr.mxu0 0.0
  %126 = vmatpush1.msra.mxu0 %v45
  %127 = vmatprep.subr.mxu0 0.0
  %128 = vmatpush1.msra.mxu0 %v46
  %129 = vmatprep.subr.mxu0 0.0
  %130 = vmatpush1.msra.mxu0 %v47
  %131 = vmatprep.subr.mxu0 0.0
  %132 = vmatpush1.msra.mxu0 %v48
  %133 = vmatprep.subr.mxu0 0.0
  %134 = vmatpush1.msra.mxu0 %v49
  %135 = vmatprep.subr.mxu0 0.0
  %136 = vmatpush1.msra.mxu0 %v50
  %137 = vmatprep.subr.mxu0 0.0
  %138 = vmatpush1.msra.mxu0 %v51
  %139 = vmatprep.subr.mxu0 0.0
  %140 = vmatpush1.msra.mxu0 %v52
  %141 = vmatprep.subr.mxu0 0.0
  %142 = vmatpush1.msra.mxu0 %v53
  %143 = vmatprep.subr.mxu0 0.0
  %144 = vmatpush1.msra.mxu0 %v54
  %145 = vmatprep.subr.mxu0 0.0
  %146 = vmatpush1.msra.mxu0 %v55
  %147 = vmatprep.subr.mxu0 0.0
  %148 = vmatpush1.msra.mxu0 %v56
  %149 = vmatprep.subr.mxu0 0.0
  %150 = vmatpush1.msra.mxu0 %v57
  %151 = vmatprep.subr.mxu0 0.0
  %152 = vmatpush1.msra.mxu0 %v58
  %153 = vmatprep.subr.mxu0 0.0
  %154 = vmatpush1.msra.mxu0 %v59
  %155 = vmatprep.subr.mxu0 0.0
  %156 = vmatpush1.msra.mxu0 %v60
  %157 = vmatprep.subr.mxu0 0.0
  %158 = vmatpush1.msra.mxu0 %v61
  %159 = vmatprep.subr.mxu0 0.0
  %160 = vmatpush1.msra.mxu0 %v62
  %161 = vmatprep.subr.mxu0 0.0
  %162 = vmatpush1.msra.mxu0 %v63
  %163 = vmatprep.mubr.f32.mxu0 %v12
  %164 = vmatmul.mubr.f32.gmra.mrb[0].mxu0 %v11
  %v165 = vpop.f32.mrb[0].mxu0
  %v166 = vadd.f32 0.0, %v165
  %v167 = vpop.f32.mrb[0].mxu0
  %168 = vmatprep.mubr.f32.mxu0 %v15
  %169 = vmatmul.mubr.f32.gmra.mrb[0].mxu0 %v14
  %v170 = vpop.f32.mrb[0].mxu0
  %v171 = vadd.f32 0.0, %v170
  %v172 = vpop.f32.mrb[0].mxu0
  %173 = vmatprep.mubr.f32.mxu0 %v18
  %174 = vmatmul.mubr.f32.gmra.mrb[0].mxu0 %v17
  %v175 = vpop.f32.mrb[0].mxu0
  %v176 = vadd.f32 0.0, %v175
  %v177 = vpop.f32.mrb[0].mxu0
  %178 = vmatprep.mubr.f32.mxu0 %v21
  %179 = vmatmul.mubr.f32.gmra.mrb[0].mxu0 %v20
  %v180 = vpop.f32.mrb[0].mxu0
  %v181 = vadd.f32 0.0, %v180
  %v182 = vpop.f32.mrb[0].mxu0
  %183 = vmatprep.mubr.f32.mxu0 %v24
  %184 = vmatmul.mubr.f32.gmra.mrb[0].mxu0 %v23
  %v185 = vpop.f32.mrb[0].mxu0
  %v186 = vadd.f32 0.0, %v185
  %v187 = vpop.f32.mrb[0].mxu0
  %188 = vmatprep.mubr.f32.mxu0 %v27
  %189 = vmatmul.mubr.f32.gmra.mrb[0].mxu0 %v26
  %v190 = vpop.f32.mrb[0].mxu0
  %v191 = vadd.f32 0.0, %v190
  %v192 = vpop.f32.mrb[0].mxu0
  %193 = vmatprep.mubr.f32.mxu0 %v30
  %194 = vmatmul.mubr.f32.gmra.mrb[0].mxu0 %v29
  %v195 = vpop.f32.mrb[0].mxu0
  %v196 = vadd.f32 0.0, %v195
  %v197 = vpop.f32.mrb[0].mxu0
  %198 = vdwg.mxu0
  %199 = vmatprep.subr.mxu0 0.0
  %200 = vmatpush1.msra.mxu0 %v64
  %201 = vmatprep.subr.mxu0 0.0
  %202 = vmatpush1.msra.mxu0 %v65
  %203 = vmatprep.subr.mxu0 0.0
  %204 = vmatpush1.msra.mxu0 %v66
  %205 = vmatprep.subr.mxu0 0.0
  %206 = vmatpush1.msra.mxu0 %v67
  %207 = vmatprep.subr.mxu0 0.0
  %208 = vmatpush1.msra.mxu0 %v68
  %209 = vmatprep.subr.mxu0 0.0
  %210 = vmatpush1.msra.mxu0 %v69
  %211 = vmatprep.subr.mxu0 0.0
  %212 = vmatpush1.msra.mxu0 %v70
  %213 = vmatprep.subr.mxu0 0.0
  %214 = vmatpush1.msra.mxu0 %v71
  %215 = vmatprep.subr.mxu0 0.0
  %216 = vmatpush1.msra.mxu0 %v97
  %217 = vmatprep.subr.mxu0 0.0
  %218 = vmatpush1.msra.mxu0 0.0
  %219 = vmatprep.subr.mxu0 0.0
  %220 = vmatpush1.msra.mxu0 0.0
  %221 = vmatprep.subr.mxu0 0.0
  %222 = vmatpush1.msra.mxu0 0.0
  %223 = vmatprep.subr.mxu0 0.0
  %224 = vmatpush1.msra.mxu0 0.0
  %225 = vmatprep.subr.mxu0 0.0
  %226 = vmatpush1.msra.mxu0 0.0
  %227 = vmatprep.subr.mxu0 0.0
  %228 = vmatpush1.msra.mxu0 0.0
  %229 = vmatprep.subr.mxu0 0.0
  %230 = vmatpush1.msra.mxu0 0.0
  %231 = vmatprep.subr.mxu0 0.0
  %232 = vmatpush1.msra.mxu0 0.0
  %233 = vmatprep.subr.mxu0 0.0
  %234 = vmatpush1.msra.mxu0 0.0
  %235 = vmatprep.subr.mxu0 0.0
  %236 = vmatpush1.msra.mxu0 0.0
  %237 = vmatprep.subr.mxu0 0.0
  %238 = vmatpush1.msra.mxu0 0.0
  %239 = vmatprep.subr.mxu0 0.0
  %240 = vmatpush1.msra.mxu0 0.0
  %241 = vmatprep.subr.mxu0 0.0
  %242 = vmatpush1.msra.mxu0 0.0
  %243 = vmatprep.subr.mxu0 0.0
  %244 = vmatpush1.msra.mxu0 0.0
  %245 = vmatprep.subr.mxu0 0.0
  %246 = vmatpush1.msra.mxu0 0.0
  %247 = vmatprep.subr.mxu0 0.0
  %248 = vmatpush1.msra.mxu0 0.0
  %249 = vmatprep.subr.mxu0 0.0
  %250 = vmatpush1.msra.mxu0 0.0
  %251 = vmatprep.subr.mxu0 0.0
  %252 = vmatpush1.msra.mxu0 0.0
  %253 = vmatprep.subr.mxu0 0.0
  %254 = vmatpush1.msra.mxu0 0.0
  %255 = vmatprep.subr.mxu0 0.0
  %256 = vmatpush1.msra.mxu0 0.0
  %257 = vmatprep.subr.mxu0 0.0
  %258 = vmatpush1.msra.mxu0 0.0
  %259 = vmatprep.subr.mxu0 0.0
  %260 = vmatpush1.msra.mxu0 0.0
  %261 = vmatprep.subr.mxu0 0.0
  %262 = vmatpush1.msra.mxu0 0.0
  %263 = vmatprep.mubr.f32.mxu0 0.0
  %264 = vmatmul.mubr.f32.gmra.mrb[0].mxu0 %v75
  %v265 = vpop.f32.mrb[0].mxu0
  %v266 = vadd.f32 %v166, %v265
  %v267 = vpop.f32.mrb[0].mxu0
  %268 = vmatprep.mubr.f32.mxu0 0.0
  %269 = vmatmul.mubr.f32.gmra.mrb[0].mxu0 %v78
  %v270 = vpop.f32.mrb[0].mxu0
  %v271 = vadd.f32 %v171, %v270
  %v272 = vpop.f32.mrb[0].mxu0
  %273 = vmatprep.mubr.f32.mxu0 0.0
  %274 = vmatmul.mubr.f32.gmra.mrb[0].mxu0 %v81
  %v275 = vpop.f32.mrb[0].mxu0
  %v276 = vadd.f32 %v176, %v275
  %v277 = vpop.f32.mrb[0].mxu0
  %278 = vmatprep.mubr.f32.mxu0 0.0
  %279 = vmatmul.mubr.f32.gmra.mrb[0].mxu0 %v84
  %v280 = vpop.f32.mrb[0].mxu0
  %v281 = vadd.f32 %v181, %v280
  %v282 = vpop.f32.mrb[0].mxu0
  %283 = vmatprep.mubr.f32.mxu0 0.0
  %284 = vmatmul.mubr.f32.gmra.mrb[0].mxu0 %v87
  %v285 = vpop.f32.mrb[0].mxu0
  %v286 = vadd.f32 %v186, %v285
  %v287 = vpop.f32.mrb[0].mxu0
  %288 = vmatprep.mubr.f32.mxu0 0.0
  %289 = vmatmul.mubr.f32.gmra.mrb[0].mxu0 %v90
  %v290 = vpop.f32.mrb[0].mxu0
  %v291 = vadd.f32 %v191, %v290
  %v292 = vpop.f32.mrb[0].mxu0
  %293 = vmatprep.mubr.f32.mxu0 0.0
  %294 = vmatmul.mubr.f32.gmra.mrb[0].mxu0 %v93
  %v295 = vpop.f32.mrb[0].mxu0
  %v296 = vadd.f32 %v196, %v295
  %v297 = vpop.f32.mrb[0].mxu0
  %298 = vdwg.mxu0
  %vm299 = vcmp.ge.f32.partialorder %v266, 0.0
  %vm300 = vcmp.ge.f32.partialorder %v271, 0.0
  %vm301 = vcmp.ge.f32.partialorder %v276, 0.0
  %vm302 = vcmp.ge.f32.partialorder %v281, 0.0
  %vm303 = vcmp.ge.f32.partialorder %v286, 0.0
  %vm304 = vcmp.ge.f32.partialorder %v291, 0.0
  %vm305 = vcmp.ge.f32.partialorder %v296, 0.0
  %v306 = vmul.f32 %v266, 0.003
  %v307 = vmul.f32 %v271, 0.003
  %v308 = vmul.f32 %v276, 0.003
  %v309 = vmul.f32 %v281, 0.003
  %v310 = vmul.f32 %v286, 0.003
  %v311 = vmul.f32 %v291, 0.003
  %v312 = vmul.f32 %v296, 0.003
  %v313 = vsel %vm299, %v266, %v306
  %v314 = vsel %vm300, %v271, %v307
  %v315 = vsel %vm301, %v276, %v308
  %v316 = vsel %vm302, %v281, %v309
  %v317 = vsel %vm303, %v286, %v310
  %v318 = vsel %vm304, %v291, %v311
  %v319 = vsel %vm305, %v296, %v312
  %320 = vst [vmem:[%s2] sm:$0xff] %v313
  %321 = vst [vmem:[%s2 + $0x8] sm:$0xff] %v314
  %322 = vst [vmem:[%s2 + $0x10] sm:$0xff] %v315
  %323 = vst [vmem:[%s2 + $0x18] sm:$0xff] %v316
  %324 = vst [vmem:[%s2 + $0x20] sm:$0xff] %v317
  %325 = vst [vmem:[%s2 + $0x28] sm:$0xff] %v318
  %326 = vst [vmem:[%s2 + $0x30] sm:$0x3f] %v319
  // Predicated region
  $region10: #{mjonet_forward.10} parent=0 // pred_check
    _
  $region11: #{mjonet_forward.10} parent=0 // pred_check_branch
    %328 = sbr.rel (0) target = $region13
  $region12: #{mjonet_forward.10} parent=0 // pred_region
    _
  $region13: #{mjonet_forward.10} parent=0 // pred_fallthru
    _
  // Predicated region
  $region14: #{mjonet_forward.10} parent=0 // pred_check
    _
  $region15: #{mjonet_forward.10} parent=0 // pred_check_branch
    %330 = sbr.rel (0) target = $region17
  $region16: #{mjonet_forward.10} parent=0 // pred_region
    _
  $region17: #{mjonet_forward.10} parent=0 // pred_fallthru
    _

// kernel: mjonet_forward.11
$region0: #{mjonet_forward.11}
  #allocation0 [shape = 'u32[]', space=smem, size = 0x4, offset = 0x4, fixed_abs, tag = 'smem constant byte address 0x4 - core index']
  #allocation1 [shape = 'u32[144,128]{1,0:T(1,128)}', space=vmem, size = 0x12000, scoped, tag = 'internal scratch']
  %s0 = inlined_call_operand.vmem [shape: f32[2,216], index: 0, kind: input, shape index: {}]
  %s1 = inlined_call_operand.vmem [shape: f32[216,8], index: 1, kind: input, shape index: {}]
  %s2 = inlined_call_operand.vmem [shape: f32[1,8], index: 2, kind: input, shape index: {}]
  %s3 = inlined_call_operand.hbm [shape: f32[2,8], index: 3, kind: output, shape index: {}]
  %s4 = sld [smem:[#allocation0]]
  $region22: #{mjonet_forward.11} parent=0
    _
  %s6 = ssub.s32 1, %s4
  %s7 = scalar_select 0, %s6, %s4
  $region1: #{mjonet_forward.11} parent=0
    #allocation2 [shape = 'u8[1024]{0}', space=vmem, size = 0x400, scoped, tag = 'output window, operand 0, single buffered']
    #allocation3 [shape = 's32[1]{0}', space=sflag, size = 0x4, scoped, tag = 'scoped memory for mjonet_forward.11']
    %8 = vsyncpa [#allocation3], 0
    // Predicated region
    $region2: #{mjonet_forward.11} parent=1 // pred_check
      _
    $region3: #{mjonet_forward.11} parent=1 // pred_check_branch
      %10 = sbr.rel (0) target = $region5
    $region4: #{mjonet_forward.11} parent=1 // pred_region
      _
    $region5: #{mjonet_forward.11} parent=1 // pred_fallthru
      _
    // Predicated region
    $region6: #{mjonet_forward.11} parent=1 // pred_check
      _
    $region7: #{mjonet_forward.11} parent=1 // pred_check_branch
      %12 = sbr.rel (0) target = $region9
    $region8: #{mjonet_forward.11} parent=1 // pred_region
      _
    $region9: #{mjonet_forward.11} parent=1 // pred_fallthru
      _
    // Predicated region
    $region10: #{mjonet_forward.11} parent=1 // pred_check
      _
    $region11: #{mjonet_forward.11} parent=1 // pred_check_branch
      %14 = sbr.rel (0) target = $region13
    $region12: #{mjonet_forward.11} parent=1 // pred_region
      _
    $region13: #{mjonet_forward.11} parent=1 // pred_fallthru
      _
    %v15 = vld [vmem:[%s0] sm:$0xf]
    %v16 = vld [vmem:[%s1] sm:$0xff]
    %v17 = vld [vmem:[%s1 + $0x8] sm:$0xff]
    %v18 = vld [vmem:[%s1 + $0x10] sm:$0xff]
    %v19 = vld [vmem:[%s1 + $0x18] sm:$0xff]
    %v20 = vld [vmem:[%s1 + $0x20] sm:$0xff]
    %v21 = vld [vmem:[%s1 + $0x28] sm:$0xff]
    %v22 = vld [vmem:[%s1 + $0x30] sm:$0xff]
    %v23 = vld [vmem:[%s1 + $0x38] sm:$0xff]
    %v24 = vld [vmem:[%s1 + $0x40] sm:$0xff]
    %v25 = vld [vmem:[%s1 + $0x48] sm:$0xff]
    %v26 = vld [vmem:[%s1 + $0x50] sm:$0xff]
    %v27 = vld [vmem:[%s1 + $0x58] sm:$0xff]
    %v28 = vld [vmem:[%s1 + $0x60] sm:$0xff]
    %v29 = vld [vmem:[%s1 + $0x68] sm:$0xff]
    %v30 = vld [vmem:[%s1 + $0x70] sm:$0xff]
    %v31 = vld [vmem:[%s1 + $0x78] sm:$0xff]
    %v32 = vld [vmem:[%s1 + $0x80] sm:$0xff]
    %v33 = vld [vmem:[%s1 + $0x88] sm:$0xff]
    %v34 = vld [vmem:[%s1 + $0x90] sm:$0xff]
    %v35 = vld [vmem:[%s1 + $0x98] sm:$0xff]
    %v36 = vld [vmem:[%s1 + $0xa0] sm:$0xff]
    %v37 = vld [vmem:[%s1 + $0xa8] sm:$0xff]
    %v38 = vld [vmem:[%s1 + $0xb0] sm:$0xff]
    %v39 = vld [vmem:[%s1 + $0xb8] sm:$0xff]
    %v40 = vld [vmem:[%s1 + $0xc0] sm:$0xff]
    %v41 = vld [vmem:[%s1 + $0xc8] sm:$0xff]
    %v42 = vld [vmem:[%s1 + $0xd0] sm:$0xff]
    %v43 = vld [vmem:[%s2] sm:$0x1]
    %v45 = vlaneseq
    %v46 = vshrl.u32 %v45, 7
    %v47 = vsub.s32 0, %v46
    %v48 = vrot.slane %v43, %v47
    %v52 = vunpack.c.l.s4 1983009808
    %v53 = vunpack.c.0.s8 %v52
    %v54 = vlaneseq
    %v55 = vshrl.u32 %v54, 7
    %v56 = vsub.s32 %v53, %v55
    %v57 = vrot.slane %v15, %v56
    %v58 = vcombine.high %v57, %v57
    %vm60 = vcmask 719872
    %v61 = vsel %vm60, %v58, 0
    %63 = vmatprep.subr.mxu0 0.0
    %64 = vmatpush1.msra.mxu0 %v16
    %65 = vmatprep.subr.mxu0 0.0
    %66 = vmatpush1.msra.mxu0 %v17
    %67 = vmatprep.subr.mxu0 0.0
    %68 = vmatpush1.msra.mxu0 %v18
    %69 = vmatprep.subr.mxu0 0.0
    %70 = vmatpush1.msra.mxu0 %v19
    %71 = vmatprep.subr.mxu0 0.0
    %72 = vmatpush1.msra.mxu0 %v20
    %73 = vmatprep.subr.mxu0 0.0
    %74 = vmatpush1.msra.mxu0 %v21
    %75 = vmatprep.subr.mxu0 0.0
    %76 = vmatpush1.msra.mxu0 %v22
    %77 = vmatprep.subr.mxu0 0.0
    %78 = vmatpush1.msra.mxu0 %v23
    %79 = vmatprep.subr.mxu0 0.0
    %80 = vmatpush1.msra.mxu0 %v24
    %81 = vmatprep.subr.mxu0 0.0
    %82 = vmatpush1.msra.mxu0 %v25
    %83 = vmatprep.subr.mxu0 0.0
    %84 = vmatpush1.msra.mxu0 %v26
    %85 = vmatprep.subr.mxu0 0.0
    %86 = vmatpush1.msra.mxu0 %v27
    %87 = vmatprep.subr.mxu0 0.0
    %88 = vmatpush1.msra.mxu0 %v28
    %89 = vmatprep.subr.mxu0 0.0
    %90 = vmatpush1.msra.mxu0 %v29
    %91 = vmatprep.subr.mxu0 0.0
    %92 = vmatpush1.msra.mxu0 %v30
    %93 = vmatprep.subr.mxu0 0.0
    %94 = vmatpush1.msra.mxu0 %v31
    %95 = vmatprep.subr.mxu0 0.0
    %96 = vmatpush1.msra.mxu0 %v32
    %97 = vmatprep.subr.mxu0 0.0
    %98 = vmatpush1.msra.mxu0 %v33
    %99 = vmatprep.subr.mxu0 0.0
    %100 = vmatpush1.msra.mxu0 %v34
    %101 = vmatprep.subr.mxu0 0.0
    %102 = vmatpush1.msra.mxu0 %v35
    %103 = vmatprep.subr.mxu0 0.0
    %104 = vmatpush1.msra.mxu0 %v36
    %105 = vmatprep.subr.mxu0 0.0
    %106 = vmatpush1.msra.mxu0 %v37
    %107 = vmatprep.subr.mxu0 0.0
    %108 = vmatpush1.msra.mxu0 %v38
    %109 = vmatprep.subr.mxu0 0.0
    %110 = vmatpush1.msra.mxu0 %v39
    %111 = vmatprep.subr.mxu0 0.0
    %112 = vmatpush1.msra.mxu0 %v40
    %113 = vmatprep.subr.mxu0 0.0
    %114 = vmatpush1.msra.mxu0 %v41
    %115 = vmatprep.subr.mxu0 0.0
    %116 = vmatpush1.msra.mxu0 %v42
    %117 = vmatprep.subr.mxu0 0.0
    %118 = vmatpush1.msra.mxu0 0.0
    %119 = vmatprep.subr.mxu0 0.0
    %120 = vmatpush1.msra.mxu0 0.0
    %121 = vmatprep.subr.mxu0 0.0
    %122 = vmatpush1.msra.mxu0 0.0
    %123 = vmatprep.subr.mxu0 0.0
    %124 = vmatpush1.msra.mxu0 0.0
    %125 = vmatprep.subr.mxu0 0.0
    %126 = vmatpush1.msra.mxu0 0.0
    %127 = vmatprep.mubr.f32.mxu0 %v61
    %128 = vmatmul.mubr.f32.gmra.mrb[0].mxu0 %v57
    %v129 = vpop.f32.mrb[0].mxu0
    %v130 = vadd.f32 %v48, %v129
    %v131 = vpop.f32.mrb[0].mxu0
    %132 = vdwg.mxu0
    %vm133 = vcmask 58368
    %v134 = vsel %vm133, %v130, -inf
    %135 = vmax.xlane.f32.xlu0 %v134
    %v136 = vpop.xlane.xlu0 %135
    %v137 = vsub.f32 %v130, %v136
    %v138 = vmul.f32 %v137, 1.442695
    %v139 = vpow.pop %v138
    %v140 = vsel %vm133, %v139, 0.0
    %141 = vadd.xlane.f32.xlu0 %v140
    %v142 = vpop.xlane.xlu0 %141
    %v143 = vlog2.pop %v142
    %v144 = vmul.f32 %v143, 0.6931472
    %v145 = vsub.f32 %v137, %v144
    %146 = vst.msk [vmem:[#allocation2] sm:$0x3] %vm133, %v145
    // Predicated region
    $region14: #{mjonet_forward.11} parent=1 // pred_check
      _
    $region15: #{mjonet_forward.11} parent=1 // pred_check_branch
      %148 = sbr.rel (0) target = $region17
    $region16: #{mjonet_forward.11} parent=1 // pred_region
      %s150 = ssub.s32 32, 32
      %151 = vsyncadd [#allocation3], %s150
      %s153 = sshll.u32 [#allocation2], 4
      %s154 = int_to_ptr.vmem [resolvable:$true] %s153
      %156 = dma.vmem_to_hbm [thread:$0]  %s154, 32, %s3, [#allocation3]
    $region17: #{mjonet_forward.11} parent=1 // pred_fallthru
      _
    // Predicated region
    $region18: #{mjonet_forward.11} parent=1 // pred_check
      _
    $region19: #{mjonet_forward.11} parent=1 // pred_check_branch
      %158 = sbr.rel (0) target = $region21
    $region20: #{mjonet_forward.11} parent=1 // pred_region
      %159 = dma.done [#allocation3], 32
    $region21: #{mjonet_forward.11} parent=1 // pred_fallthru
      _
    %160 = vsyncpa [#allocation3], 1

</llo_original>
